<compile_context>
chip_gen: v6e
topology: v6e:2x2x1
jax: 0.10.0
libtpu: 0.0.40
codegen_flags: <defaults>
</compile_context>

<pallas_src>
import functools

import jax
import jax.numpy as jnp
from jax.experimental import pallas as pl
from jax.experimental.pallas import tpu as pltpu

LN_EPS = 1e-5  # torch nn.LayerNorm default eps


# ----------------------------- kernel helpers -----------------------------

def _layer_norm(y, gamma, beta):
    """LayerNorm over the last dim; statistics in f32."""
    mu = jnp.mean(y, axis=-1, keepdims=True)
    var = jnp.mean(jnp.square(y - mu), axis=-1, keepdims=True)
    return (y - mu) * jax.lax.rsqrt(var + LN_EPS) * gamma + beta


def _full_spec(shape):
    """Whole-array block whose index is the same for every grid step
    (Pallas keeps it resident across the batch-tiled grid)."""
    zeros = (0,) * len(shape)
    return pl.BlockSpec(shape, lambda *_: zeros)


def _row_tile(n, max_tile):
    """Row tile for the batch axis: <= max_tile; when the whole batch fits,
    split into 2 even steps when possible so the 'parallel' grid axis can
    feed both TensorCores on v7x."""
    if n > max_tile:
        return max_tile
    if n >= 16 and n % 16 == 0:
        return n // 2
    return n


# ----------------------------- fused kernel -----------------------------

def _make_fused_kernel(layer_N, use_relu, compute_dtype):
    act = (lambda v: jnp.maximum(v, 0.0)) if use_relu else jnp.tanh

    def kernel(x_ref, w1_ref, b1_ref, g1_ref, be1_ref,
               wh_ref, bh_ref, gh_ref, beh_ref, o_ref):
        # fc1 (with the token/channel mix pre-folded into w1/b1):
        #   Linear(feat, H) + act + LayerNorm(H)
        xb = x_ref[...].astype(compute_dtype)
        y = jnp.dot(xb, w1_ref[...],
                    preferred_element_type=jnp.float32) + b1_ref[...]
        y = _layer_norm(act(y), g1_ref[...], be1_ref[...])
        # fc2 clones: Linear(H, H) + act + LayerNorm(H), static unroll
        for l in range(layer_N):
            y = jnp.dot(y.astype(compute_dtype), wh_ref[l],
                        preferred_element_type=jnp.float32) + bh_ref[l]
            y = _layer_norm(act(y), gh_ref[l], beh_ref[l])
        o_ref[...] = y.astype(o_ref.dtype)

    return kernel


# ----------------------------- wrapper -----------------------------

def _fold_mix_into_fc1(wt_t, bt, wc_t, bc, w1_t, b1, feat):
    """Compose token_mlp∘channel_mlp (exact: no activation between them) and
    fold the resulting block-diagonal 60x60 mix into fc1's weight/bias."""
    w_mix_t = wt_t @ wc_t                 # (60, 60):  x @ Wt^T @ Wc^T
    b_mix = bt @ wc_t + bc                # (1, 60)
    C = feat // 3600
    H = w1_t.shape[1]
    w1_r = w1_t.reshape(C, 60, 60, H)     # indexed (c, r, k, h)
    w1_eff = jnp.einsum('jk,crkh->crjh', w_mix_t, w1_r).reshape(feat, H)
    b1_eff = b1 + jnp.einsum('k,crkh->h', b_mix[0], w1_r)[None, :]
    return w1_eff, b1_eff


def mixer_base2_forward(x, params, *, layer_N=1, use_relu=True,
                        use_feature_normalization=False,
                        compute_dtype=jnp.bfloat16, batch_tile=512):
    # TODO(synk): use_feature_normalization=True branch (nn.LayerNorm(60*60)
    # pre-norm) not implemented in-kernel; this configuration uses False.
    assert not use_feature_normalization

    B = x.shape[0]
    x_flat = x.reshape(B, -1)
    feat = x_flat.shape[1]
    assert feat % 3600 == 0, "features must be C*60*60"

    # Fold the entire mix stage into fc1 (tiny einsum in plain JAX); the whole
    # forward then becomes a single pallas_call with no HBM intermediate.
    w1_eff, b1_eff = _fold_mix_into_fc1(params["wt_t"], params["bt"],
                                        params["wc_t"], params["bc"],
                                        params["w1_t"], params["b1"], feat)
    H = w1_eff.shape[1]

    # Pre-cast matmul weights to the compute dtype (bf16 on v6e/v7x MXU);
    # accumulation and LayerNorm stay in f32 inside the kernel.
    w1_c = w1_eff.astype(compute_dtype)
    wh_c = params["wh_t"].astype(compute_dtype)

    tb = _row_tile(B, batch_tile)
    grid = (pl.cdiv(B, tb),)
    kernel = _make_fused_kernel(layer_N, use_relu, compute_dtype)

    in_bytes = int(x_flat.size) * x_flat.dtype.itemsize
    w_bytes = int(w1_c.size) * w1_c.dtype.itemsize + int(wh_c.size) * wh_c.dtype.itemsize
    cost = pl.CostEstimate(
        flops=2 * B * feat * H + layer_N * 2 * B * H * H + 10 * B * H * (1 + layer_N),
        transcendentals=B * (1 + layer_N),          # one rsqrt per LayerNorm row
        bytes_accessed=in_bytes + w_bytes + B * H * 4,
    )

    return pl.pallas_call(
        kernel,
        out_shape=jax.ShapeDtypeStruct((B, H), jnp.float32),
        grid=grid,
        in_specs=[
            pl.BlockSpec((tb, feat), lambda i: (i, 0)),
            _full_spec(w1_c.shape), _full_spec(b1_eff.shape),
            _full_spec(params["g1"].shape), _full_spec(params["be1"].shape),
            _full_spec(wh_c.shape), _full_spec(params["bh"].shape),
            _full_spec(params["gh"].shape), _full_spec(params["beh"].shape),
        ],
        out_specs=pl.BlockSpec((tb, H), lambda i: (i, 0)),
        compiler_params=pltpu.CompilerParams(
            dimension_semantics=("parallel",),
            vmem_limit_bytes=32 * 1024 * 1024),
        cost_estimate=cost,
    )(x_flat, w1_c, b1_eff, params["g1"], params["be1"],
      wh_c, params["bh"], params["gh"], params["beh"])


# ----------------------------- params & reference -----------------------------

def init_params(key, obs_dim=3600, hidden_size=64, layer_N=1):
    ks = jax.random.split(key, 10)

    def u(k, shape, scale):
        return jax.random.uniform(k, shape, jnp.float32, -1.0, 1.0) * scale

    H = hidden_size
    wt = u(ks[0], (60, 60), 0.1)                    # token_mlp  Linear(60, 60)
    wc = u(ks[1], (60, 60), 0.1)                    # channel_mlp Linear(60, 60)
    w1 = u(ks[2], (H, obs_dim), 0.02)               # fc1 Linear(obs_dim, H)
    wh = u(ks[3], (layer_N, H, H), 0.1)             # fc_h clones Linear(H, H)
    # Non-zero biases / LN params to exercise the full fold algebra
    # (torch's init_ zeroes biases; any values keep the same forward math).
    return dict(
        wt_t=wt.T, bt=u(ks[4], (1, 60), 0.02),
        wc_t=wc.T, bc=u(ks[5], (1, 60), 0.02),
        w1_t=w1.T, b1=u(ks[6], (1, H), 0.02),
        g1=1.0 + u(ks[7], (1, H), 0.1), be1=u(ks[8], (1, H), 0.05),
        wh_t=jnp.transpose(wh, (0, 2, 1)),
        bh=u(ks[9], (layer_N, 1, H), 0.02),
        gh=jnp.ones((layer_N, 1, H), jnp.float32),
        beh=jnp.zeros((layer_N, 1, H), jnp.float32),
    )


def _reference_forward(x, params, layer_N=1):
    """Pure-jnp reference mirroring the torch forward (unfused)."""
    B = x.shape[0]
    h = x.reshape(B, -1, 60, 60).astype(jnp.float32)
    h = h @ params["wt_t"] + params["bt"]            # token_mlp
    h = jnp.transpose(h, (0, 2, 1, 3))
    h = h @ params["wc_t"] + params["bc"]            # channel_mlp
    h = jnp.transpose(h, (0, 2, 1, 3))
    h = h.reshape(B, -1)

    def block(v, w_t, b, g, be):
        v = jnp.maximum(v @ w_t + b, 0.0)
        mu = v.mean(-1, keepdims=True)
        var = ((v - mu) ** 2).mean(-1, keepdims=True)
        return (v - mu) / jnp.sqrt(var + LN_EPS) * g + be

    y = block(h, params["w1_t"], params["b1"], params["g1"], params["be1"])
    for l in range(layer_N):
        y = block(y, params["wh_t"][l], params["bh"][l], params["gh"][l],
                  params["beh"][l])
    return y


if __name__ == "__main__":
    B, HIDDEN, LAYER_N = 2, 64, 1
    key = jax.random.PRNGKey(0)
    kx, kp = jax.random.split(key)
    x = jax.random.normal(kx, (B, 3600), jnp.float32)   # obs = (B, 60*60), stacked_frames=1
    params = init_params(kp, obs_dim=3600, hidden_size=HIDDEN, layer_N=LAYER_N)

    ref = _reference_forward(x, params, layer_N=LAYER_N)

    # 1) f32-compute path: validates that the mix->fc1 fold is exact.
    fwd_f32 = jax.jit(functools.partial(mixer_base2_forward, layer_N=LAYER_N,
                                        use_relu=True,
                                        use_feature_normalization=False,
                                        compute_dtype=jnp.float32))
    out_f32 = jax.block_until_ready(fwd_f32(x, params))
    assert out_f32.shape == (B, HIDDEN), out_f32.shape
    assert bool(jnp.all(jnp.isfinite(out_f32)))
    assert bool(jnp.allclose(out_f32, ref, rtol=2e-3, atol=2e-3)), \
        "f32 kernel mismatch vs reference"

    # 2) bf16 MXU-operand path (f32 accumulation + f32 LayerNorm stats).
    fwd_bf16 = jax.jit(functools.partial(mixer_base2_forward, layer_N=LAYER_N,
                                         use_relu=True,
                                         use_feature_normalization=False,
                                         compute_dtype=jnp.bfloat16))
    out_bf16 = jax.block_until_ready(fwd_bf16(x, params))
    assert out_bf16.shape == (B, HIDDEN), out_bf16.shape
    assert bool(jnp.all(jnp.isfinite(out_bf16)))
    assert bool(jnp.allclose(out_bf16, ref, rtol=1e-1, atol=1e-1)), \
        "bf16 kernel mismatch vs reference"

    print("KERNEL_OK")
</pallas_src>

<mosaic_0001>
module attributes {stable_mosaic.version = 11 : i64} {
  func.func @kernel(%arg0: i32, %arg1: memref<2x3600xf32, #tpu.memory_space<vmem>>, %arg2: memref<3600x64xf32, #tpu.memory_space<vmem>>, %arg3: memref<1x64xf32, #tpu.memory_space<vmem>>, %arg4: memref<1x64xf32, #tpu.memory_space<vmem>>, %arg5: memref<1x64xf32, #tpu.memory_space<vmem>>, %arg6: memref<1x64x64xf32, #tpu.memory_space<vmem>>, %arg7: memref<1x1x64xf32, #tpu.memory_space<vmem>>, %arg8: memref<1x1x64xf32, #tpu.memory_space<vmem>>, %arg9: memref<1x1x64xf32, #tpu.memory_space<vmem>>, %arg10: memref<2x64xf32, #tpu.memory_space<vmem>>) attributes {dimension_semantics = [#tpu.dimension_semantics<parallel>], iteration_bounds = array<i64: 1>, scalar_prefetch = 0 : i64, scratch_operands = 0 : i64, tpu.core_type = #tpu.core_type<tc>, window_params = [{transform_indices = @transform_0, window_bounds = array<i64: 2, 3600>}, {pipeline_mode = #tpu.pipeline_mode<synchronous>, transform_indices = @transform_1, window_bounds = array<i64: 3600, 64>}, {pipeline_mode = #tpu.pipeline_mode<synchronous>, transform_indices = @transform_2, window_bounds = array<i64: 1, 64>}, {pipeline_mode = #tpu.pipeline_mode<synchronous>, transform_indices = @transform_3, window_bounds = array<i64: 1, 64>}, {pipeline_mode = #tpu.pipeline_mode<synchronous>, transform_indices = @transform_4, window_bounds = array<i64: 1, 64>}, {pipeline_mode = #tpu.pipeline_mode<synchronous>, transform_indices = @transform_5, window_bounds = array<i64: 1, 64, 64>}, {pipeline_mode = #tpu.pipeline_mode<synchronous>, transform_indices = @transform_6, window_bounds = array<i64: 1, 1, 64>}, {pipeline_mode = #tpu.pipeline_mode<synchronous>, transform_indices = @transform_7, window_bounds = array<i64: 1, 1, 64>}, {pipeline_mode = #tpu.pipeline_mode<synchronous>, transform_indices = @transform_8, window_bounds = array<i64: 1, 1, 64>}, {transform_indices = @transform_9, window_bounds = array<i64: 2, 64>}]} {
    %c0 = arith.constant 0 : index
    %c0_0 = arith.constant 0 : index
    %0 = vector.load %arg1[%c0, %c0_0] : memref<2x3600xf32, #tpu.memory_space<vmem>>, vector<2x3600xf32>
    %c0_1 = arith.constant 0 : index
    %c0_2 = arith.constant 0 : index
    %1 = vector.load %arg2[%c0_1, %c0_2] : memref<3600x64xf32, #tpu.memory_space<vmem>>, vector<3600x64xf32>
    %cst = arith.constant dense<0.000000e+00> : vector<2x64xf32>
    %2 = tpu.matmul %0, %1, %cst {dimension_numbers = #tpu.dot_dimension_numbers<[1], [0], [0], [1], [0, 0, 1, 1], [], []>} : vector<2x3600xf32>, vector<3600x64xf32>, vector<2x64xf32> -> vector<2x64xf32>
    %c0_3 = arith.constant 0 : index
    %c0_4 = arith.constant 0 : index
    %3 = vector.load %arg3[%c0_3, %c0_4] : memref<1x64xf32, #tpu.memory_space<vmem>>, vector<1x64xf32>
    %4 = vector.broadcast %3 : vector<1x64xf32> to vector<2x64xf32>
    %5 = arith.addf %2, %4 : vector<2x64xf32>
    %cst_5 = arith.constant 0.000000e+00 : f32
    %6 = vector.broadcast %cst_5 : f32 to vector<2x64xf32>
    %7 = arith.maximumf %5, %6 : vector<2x64xf32>
    %c0_6 = arith.constant 0 : index
    %c0_7 = arith.constant 0 : index
    %8 = vector.load %arg4[%c0_6, %c0_7] : memref<1x64xf32, #tpu.memory_space<vmem>>, vector<1x64xf32>
    %c0_8 = arith.constant 0 : index
    %c0_9 = arith.constant 0 : index
    %9 = vector.load %arg5[%c0_8, %c0_9] : memref<1x64xf32, #tpu.memory_space<vmem>>, vector<1x64xf32>
    %cst_10 = arith.constant dense<0.000000e+00> : vector<2xf32>
    %10 = vector.multi_reduction <add>, %7, %cst_10 [1] : vector<2x64xf32> to vector<2xf32>
    %11 = vector.shape_cast %10 : vector<2xf32> to vector<2x1xf32>
    %cst_11 = arith.constant 6.400000e+01 : f32
    %12 = vector.broadcast %cst_11 : f32 to vector<2x1xf32>
    %13 = arith.divf %11, %12 : vector<2x1xf32>
    %14 = vector.broadcast %13 : vector<2x1xf32> to vector<2x64xf32>
    %15 = arith.subf %7, %14 : vector<2x64xf32>
    %16 = arith.mulf %15, %15 : vector<2x64xf32>
    %cst_12 = arith.constant dense<0.000000e+00> : vector<2xf32>
    %17 = vector.multi_reduction <add>, %16, %cst_12 [1] : vector<2x64xf32> to vector<2xf32>
    %18 = vector.shape_cast %17 : vector<2xf32> to vector<2x1xf32>
    %cst_13 = arith.constant 6.400000e+01 : f32
    %19 = vector.broadcast %cst_13 : f32 to vector<2x1xf32>
    %20 = arith.divf %18, %19 : vector<2x1xf32>
    %21 = vector.broadcast %13 : vector<2x1xf32> to vector<2x64xf32>
    %22 = arith.subf %7, %21 : vector<2x64xf32>
    %cst_14 = arith.constant 9.99999974E-6 : f32
    %23 = vector.broadcast %cst_14 : f32 to vector<2x1xf32>
    %24 = arith.addf %20, %23 : vector<2x1xf32>
    %25 = math.rsqrt %24 : vector<2x1xf32>
    %26 = vector.broadcast %25 : vector<2x1xf32> to vector<2x64xf32>
    %27 = arith.mulf %22, %26 : vector<2x64xf32>
    %28 = vector.broadcast %8 : vector<1x64xf32> to vector<2x64xf32>
    %29 = arith.mulf %27, %28 : vector<2x64xf32>
    %30 = vector.broadcast %9 : vector<1x64xf32> to vector<2x64xf32>
    %31 = arith.addf %29, %30 : vector<2x64xf32>
    %c0_15 = arith.constant 0 : index
    %c0_16 = arith.constant 0 : index
    %c0_17 = arith.constant 0 : index
    %32 = vector.load %arg6[%c0_15, %c0_16, %c0_17] : memref<1x64x64xf32, #tpu.memory_space<vmem>>, vector<1x64x64xf32>
    %33 = vector.shape_cast %32 : vector<1x64x64xf32> to vector<64x64xf32>
    %cst_18 = arith.constant dense<0.000000e+00> : vector<2x64xf32>
    %34 = tpu.matmul %31, %33, %cst_18 {dimension_numbers = #tpu.dot_dimension_numbers<[1], [0], [0], [1], [0, 0, 1, 1], [], []>} : vector<2x64xf32>, vector<64x64xf32>, vector<2x64xf32> -> vector<2x64xf32>
    %c0_19 = arith.constant 0 : index
    %c0_20 = arith.constant 0 : index
    %c0_21 = arith.constant 0 : index
    %35 = vector.load %arg7[%c0_19, %c0_20, %c0_21] : memref<1x1x64xf32, #tpu.memory_space<vmem>>, vector<1x1x64xf32>
    %36 = vector.shape_cast %35 : vector<1x1x64xf32> to vector<1x64xf32>
    %37 = vector.broadcast %36 : vector<1x64xf32> to vector<2x64xf32>
    %38 = arith.addf %34, %37 : vector<2x64xf32>
    %cst_22 = arith.constant 0.000000e+00 : f32
    %39 = vector.broadcast %cst_22 : f32 to vector<2x64xf32>
    %40 = arith.maximumf %38, %39 : vector<2x64xf32>
    %c0_23 = arith.constant 0 : index
    %c0_24 = arith.constant 0 : index
    %c0_25 = arith.constant 0 : index
    %41 = vector.load %arg8[%c0_23, %c0_24, %c0_25] : memref<1x1x64xf32, #tpu.memory_space<vmem>>, vector<1x1x64xf32>
    %42 = vector.shape_cast %41 : vector<1x1x64xf32> to vector<1x64xf32>
    %c0_26 = arith.constant 0 : index
    %c0_27 = arith.constant 0 : index
    %c0_28 = arith.constant 0 : index
    %43 = vector.load %arg9[%c0_26, %c0_27, %c0_28] : memref<1x1x64xf32, #tpu.memory_space<vmem>>, vector<1x1x64xf32>
    %44 = vector.shape_cast %43 : vector<1x1x64xf32> to vector<1x64xf32>
    %cst_29 = arith.constant dense<0.000000e+00> : vector<2xf32>
    %45 = vector.multi_reduction <add>, %40, %cst_29 [1] : vector<2x64xf32> to vector<2xf32>
    %46 = vector.shape_cast %45 : vector<2xf32> to vector<2x1xf32>
    %cst_30 = arith.constant 6.400000e+01 : f32
    %47 = vector.broadcast %cst_30 : f32 to vector<2x1xf32>
    %48 = arith.divf %46, %47 : vector<2x1xf32>
    %49 = vector.broadcast %48 : vector<2x1xf32> to vector<2x64xf32>
    %50 = arith.subf %40, %49 : vector<2x64xf32>
    %51 = arith.mulf %50, %50 : vector<2x64xf32>
    %cst_31 = arith.constant dense<0.000000e+00> : vector<2xf32>
    %52 = vector.multi_reduction <add>, %51, %cst_31 [1] : vector<2x64xf32> to vector<2xf32>
    %53 = vector.shape_cast %52 : vector<2xf32> to vector<2x1xf32>
    %cst_32 = arith.constant 6.400000e+01 : f32
    %54 = vector.broadcast %cst_32 : f32 to vector<2x1xf32>
    %55 = arith.divf %53, %54 : vector<2x1xf32>
    %56 = vector.broadcast %48 : vector<2x1xf32> to vector<2x64xf32>
    %57 = arith.subf %40, %56 : vector<2x64xf32>
    %cst_33 = arith.constant 9.99999974E-6 : f32
    %58 = vector.broadcast %cst_33 : f32 to vector<2x1xf32>
    %59 = arith.addf %55, %58 : vector<2x1xf32>
    %60 = math.rsqrt %59 : vector<2x1xf32>
    %61 = vector.broadcast %60 : vector<2x1xf32> to vector<2x64xf32>
    %62 = arith.mulf %57, %61 : vector<2x64xf32>
    %63 = vector.broadcast %42 : vector<1x64xf32> to vector<2x64xf32>
    %64 = arith.mulf %62, %63 : vector<2x64xf32>
    %65 = vector.broadcast %44 : vector<1x64xf32> to vector<2x64xf32>
    %66 = arith.addf %64, %65 : vector<2x64xf32>
    %c0_34 = arith.constant 0 : index
    %c0_35 = arith.constant 0 : index
    %67 = vector.load %arg10[%c0_34, %c0_35] : memref<2x64xf32, #tpu.memory_space<vmem>>, vector<2x64xf32>
    tpu.vector_store %arg10[%c0_34, %c0_35], %66 {strides = array<i32>} : memref<2x64xf32, #tpu.memory_space<vmem>>, vector<2x64xf32>,
    return
  }
  func.func @transform_0(%arg0: i32) -> (i32, i32) {
    %c0_i32 = arith.constant 0 : i32
    %c0_i32_0 = arith.constant 0 : i32
    return %arg0, %c0_i32 : i32, i32
  }
  func.func @transform_1(%arg0: i32) -> (i32, i32) {
    %c0_i32 = arith.constant 0 : i32
    %c0_i32_0 = arith.constant 0 : i32
    %c0_i32_1 = arith.constant 0 : i32
    return %c0_i32, %c0_i32_0 : i32, i32
  }
  func.func @transform_2(%arg0: i32) -> (i32, i32) {
    %c0_i32 = arith.constant 0 : i32
    %c0_i32_0 = arith.constant 0 : i32
    %c0_i32_1 = arith.constant 0 : i32
    return %c0_i32, %c0_i32_0 : i32, i32
  }
  func.func @transform_3(%arg0: i32) -> (i32, i32) {
    %c0_i32 = arith.constant 0 : i32
    %c0_i32_0 = arith.constant 0 : i32
    %c0_i32_1 = arith.constant 0 : i32
    return %c0_i32, %c0_i32_0 : i32, i32
  }
  func.func @transform_4(%arg0: i32) -> (i32, i32) {
    %c0_i32 = arith.constant 0 : i32
    %c0_i32_0 = arith.constant 0 : i32
    %c0_i32_1 = arith.constant 0 : i32
    return %c0_i32, %c0_i32_0 : i32, i32
  }
  func.func @transform_5(%arg0: i32) -> (i32, i32, i32) {
    %c0_i32 = arith.constant 0 : i32
    %c0_i32_0 = arith.constant 0 : i32
    %c0_i32_1 = arith.constant 0 : i32
    %c0_i32_2 = arith.constant 0 : i32
    return %c0_i32, %c0_i32_0, %c0_i32_1 : i32, i32, i32
  }
  func.func @transform_6(%arg0: i32) -> (i32, i32, i32) {
    %c0_i32 = arith.constant 0 : i32
    %c0_i32_0 = arith.constant 0 : i32
    %c0_i32_1 = arith.constant 0 : i32
    %c0_i32_2 = arith.constant 0 : i32
    return %c0_i32, %c0_i32_0, %c0_i32_1 : i32, i32, i32
  }
  func.func @transform_7(%arg0: i32) -> (i32, i32, i32) {
    %c0_i32 = arith.constant 0 : i32
    %c0_i32_0 = arith.constant 0 : i32
    %c0_i32_1 = arith.constant 0 : i32
    %c0_i32_2 = arith.constant 0 : i32
    return %c0_i32, %c0_i32_0, %c0_i32_1 : i32, i32, i32
  }
  func.func @transform_8(%arg0: i32) -> (i32, i32, i32) {
    %c0_i32 = arith.constant 0 : i32
    %c0_i32_0 = arith.constant 0 : i32
    %c0_i32_1 = arith.constant 0 : i32
    %c0_i32_2 = arith.constant 0 : i32
    return %c0_i32, %c0_i32_0, %c0_i32_1 : i32, i32, i32
  }
  func.func @transform_9(%arg0: i32) -> (i32, i32) {
    %c0_i32 = arith.constant 0 : i32
    %c0_i32_0 = arith.constant 0 : i32
    return %arg0, %c0_i32 : i32, i32
  }
}

</mosaic_0001>

<llo_original>
// kernel: mixer_base2_forward.1
$region0: #{mixer_base2_forward.1}
  #allocation0 [shape = 'u32[]', space=smem, size = 0x4, offset = 0x4, fixed_abs, tag = 'smem constant byte address 0x4 - core index']
  #allocation1 [shape = 'u32[144,128]{1,0:T(1,128)}', space=vmem, size = 0x12000, scoped, tag = 'internal scratch']
  %s0 = inlined_call_operand.vmem [shape: f32[2,3600], index: 0, kind: input, shape index: {}]
  %s1 = inlined_call_operand.vmem [shape: f32[3600,64], index: 1, kind: input, shape index: {}]
  %s2 = inlined_call_operand.vmem [shape: f32[1,64], index: 2, kind: input, shape index: {}]
  %s3 = inlined_call_operand.vmem [shape: f32[1,64], index: 3, kind: input, shape index: {}]
  %s4 = inlined_call_operand.vmem [shape: f32[1,64], index: 4, kind: input, shape index: {}]
  %s5 = inlined_call_operand.vmem [shape: f32[1,64,64], index: 5, kind: input, shape index: {}]
  %s6 = inlined_call_operand.vmem [shape: f32[1,1,64], index: 6, kind: input, shape index: {}]
  %s7 = inlined_call_operand.vmem [shape: f32[1,1,64], index: 7, kind: input, shape index: {}]
  %s8 = inlined_call_operand.vmem [shape: f32[1,1,64], index: 8, kind: input, shape index: {}]
  %s9 = inlined_call_operand.hbm [shape: f32[2,64], index: 9, kind: output, shape index: {}]
  %s10 = sld [smem:[#allocation0]]
  $region46: #{mixer_base2_forward.1} parent=0
    _
  %s12 = ssub.s32 1, %s10
  %s13 = scalar_select 0, %s12, %s10
  $region1: #{mixer_base2_forward.1} parent=0
    #allocation2 [shape = 'u8[1024]{0}', space=vmem, size = 0x400, scoped, tag = 'output window, operand 0, single buffered']
    #allocation3 [shape = 's32[1]{0}', space=sflag, size = 0x4, scoped, tag = 'scoped memory for mixer_base2_forward.1']
    %14 = vsyncpa [#allocation3], 0
    // Predicated region
    $region2: #{mixer_base2_forward.1} parent=1 // pred_check
      _
    $region3: #{mixer_base2_forward.1} parent=1 // pred_check_branch
      %16 = sbr.rel (0) target = $region5
    $region4: #{mixer_base2_forward.1} parent=1 // pred_region
      _
    $region5: #{mixer_base2_forward.1} parent=1 // pred_fallthru
      _
    // Predicated region
    $region6: #{mixer_base2_forward.1} parent=1 // pred_check
      _
    $region7: #{mixer_base2_forward.1} parent=1 // pred_check_branch
      %18 = sbr.rel (0) target = $region9
    $region8: #{mixer_base2_forward.1} parent=1 // pred_region
      _
    $region9: #{mixer_base2_forward.1} parent=1 // pred_fallthru
      _
    // Predicated region
    $region10: #{mixer_base2_forward.1} parent=1 // pred_check
      _
    $region11: #{mixer_base2_forward.1} parent=1 // pred_check_branch
      %20 = sbr.rel (0) target = $region13
    $region12: #{mixer_base2_forward.1} parent=1 // pred_region
      _
    $region13: #{mixer_base2_forward.1} parent=1 // pred_fallthru
      _
    // Predicated region
    $region14: #{mixer_base2_forward.1} parent=1 // pred_check
      _
    $region15: #{mixer_base2_forward.1} parent=1 // pred_check_branch
      %22 = sbr.rel (0) target = $region17
    $region16: #{mixer_base2_forward.1} parent=1 // pred_region
      _
    $region17: #{mixer_base2_forward.1} parent=1 // pred_fallthru
      _
    // Predicated region
    $region18: #{mixer_base2_forward.1} parent=1 // pred_check
      _
    $region19: #{mixer_base2_forward.1} parent=1 // pred_check_branch
      %24 = sbr.rel (0) target = $region21
    $region20: #{mixer_base2_forward.1} parent=1 // pred_region
      _
    $region21: #{mixer_base2_forward.1} parent=1 // pred_fallthru
      _
    // Predicated region
    $region22: #{mixer_base2_forward.1} parent=1 // pred_check
      _
    $region23: #{mixer_base2_forward.1} parent=1 // pred_check_branch
      %26 = sbr.rel (0) target = $region25
    $region24: #{mixer_base2_forward.1} parent=1 // pred_region
      _
    $region25: #{mixer_base2_forward.1} parent=1 // pred_fallthru
      _
    // Predicated region
    $region26: #{mixer_base2_forward.1} parent=1 // pred_check
      _
    $region27: #{mixer_base2_forward.1} parent=1 // pred_check_branch
      %28 = sbr.rel (0) target = $region29
    $region28: #{mixer_base2_forward.1} parent=1 // pred_region
      _
    $region29: #{mixer_base2_forward.1} parent=1 // pred_fallthru
      _
    // Predicated region
    $region30: #{mixer_base2_forward.1} parent=1 // pred_check
      _
    $region31: #{mixer_base2_forward.1} parent=1 // pred_check_branch
      %30 = sbr.rel (0) target = $region33
    $region32: #{mixer_base2_forward.1} parent=1 // pred_region
      _
    $region33: #{mixer_base2_forward.1} parent=1 // pred_fallthru
      _
    // Predicated region
    $region34: #{mixer_base2_forward.1} parent=1 // pred_check
      _
    $region35: #{mixer_base2_forward.1} parent=1 // pred_check_branch
      %32 = sbr.rel (0) target = $region37
    $region36: #{mixer_base2_forward.1} parent=1 // pred_region
      _
    $region37: #{mixer_base2_forward.1} parent=1 // pred_fallthru
      _
    %v33 = vld [vmem:[%s0] sm:$0xff]
    %v34 = vld [vmem:[%s0 + $0x8] sm:$0xff]
    %v35 = vld [vmem:[%s0 + $0x10] sm:$0xff]
    %v36 = vld [vmem:[%s0 + $0x18] sm:$0xff]
    %v37 = vld [vmem:[%s0 + $0x20] sm:$0xff]
    %v38 = vld [vmem:[%s0 + $0x28] sm:$0xff]
    %v39 = vld [vmem:[%s0 + $0x30] sm:$0xff]
    %v40 = vld [vmem:[%s0 + $0x38] sm:$0x3]
    %v41 = vld [vmem:[%s1] sm:$0xff]
    %v42 = vld [vmem:[%s1 + $0x8] sm:$0xff]
    %v43 = vld [vmem:[%s1 + $0x10] sm:$0xff]
    %v44 = vld [vmem:[%s1 + $0x18] sm:$0xff]
    %v45 = vld [vmem:[%s1 + $0x20] sm:$0xff]
    %v46 = vld [vmem:[%s1 + $0x28] sm:$0xff]
    %v47 = vld [vmem:[%s1 + $0x30] sm:$0xff]
    %v48 = vld [vmem:[%s1 + $0x38] sm:$0xff]
    %v49 = vld [vmem:[%s1 + $0x40] sm:$0xff]
    %v50 = vld [vmem:[%s1 + $0x48] sm:$0xff]
    %v51 = vld [vmem:[%s1 + $0x50] sm:$0xff]
    %v52 = vld [vmem:[%s1 + $0x58] sm:$0xff]
    %v53 = vld [vmem:[%s1 + $0x60] sm:$0xff]
    %v54 = vld [vmem:[%s1 + $0x68] sm:$0xff]
    %v55 = vld [vmem:[%s1 + $0x70] sm:$0xff]
    %v56 = vld [vmem:[%s1 + $0x78] sm:$0xff]
    %v57 = vld [vmem:[%s1 + $0x80] sm:$0xff]
    %v58 = vld [vmem:[%s1 + $0x88] sm:$0xff]
    %v59 = vld [vmem:[%s1 + $0x90] sm:$0xff]
    %v60 = vld [vmem:[%s1 + $0x98] sm:$0xff]
    %v61 = vld [vmem:[%s1 + $0xa0] sm:$0xff]
    %v62 = vld [vmem:[%s1 + $0xa8] sm:$0xff]
    %v63 = vld [vmem:[%s1 + $0xb0] sm:$0xff]
    %v64 = vld [vmem:[%s1 + $0xb8] sm:$0xff]
    %v65 = vld [vmem:[%s1 + $0xc0] sm:$0xff]
    %v66 = vld [vmem:[%s1 + $0xc8] sm:$0xff]
    %v67 = vld [vmem:[%s1 + $0xd0] sm:$0xff]
    %v68 = vld [vmem:[%s1 + $0xd8] sm:$0xff]
    %v69 = vld [vmem:[%s1 + $0xe0] sm:$0xff]
    %v70 = vld [vmem:[%s1 + $0xe8] sm:$0xff]
    %v71 = vld [vmem:[%s1 + $0xf0] sm:$0xff]
    %v72 = vld [vmem:[%s1 + $0xf8] sm:$0xff]
    %v73 = vld [vmem:[%s1 + $0x100] sm:$0xff]
    %v74 = vld [vmem:[%s1 + $0x108] sm:$0xff]
    %v75 = vld [vmem:[%s1 + $0x110] sm:$0xff]
    %v76 = vld [vmem:[%s1 + $0x118] sm:$0xff]
    %v77 = vld [vmem:[%s1 + $0x120] sm:$0xff]
    %v78 = vld [vmem:[%s1 + $0x128] sm:$0xff]
    %v79 = vld [vmem:[%s1 + $0x130] sm:$0xff]
    %v80 = vld [vmem:[%s1 + $0x138] sm:$0xff]
    %v81 = vld [vmem:[%s1 + $0x140] sm:$0xff]
    %v82 = vld [vmem:[%s1 + $0x148] sm:$0xff]
    %v83 = vld [vmem:[%s1 + $0x150] sm:$0xff]
    %v84 = vld [vmem:[%s1 + $0x158] sm:$0xff]
    %v85 = vld [vmem:[%s1 + $0x160] sm:$0xff]
    %v86 = vld [vmem:[%s1 + $0x168] sm:$0xff]
    %v87 = vld [vmem:[%s1 + $0x170] sm:$0xff]
    %v88 = vld [vmem:[%s1 + $0x178] sm:$0xff]
    %v89 = vld [vmem:[%s1 + $0x180] sm:$0xff]
    %v90 = vld [vmem:[%s1 + $0x188] sm:$0xff]
    %v91 = vld [vmem:[%s1 + $0x190] sm:$0xff]
    %v92 = vld [vmem:[%s1 + $0x198] sm:$0xff]
    %v93 = vld [vmem:[%s1 + $0x1a0] sm:$0xff]
    %v94 = vld [vmem:[%s1 + $0x1a8] sm:$0xff]
    %v95 = vld [vmem:[%s1 + $0x1b0] sm:$0xff]
    %v96 = vld [vmem:[%s1 + $0x1b8] sm:$0xff]
    %v97 = vld [vmem:[%s1 + $0x1c0] sm:$0xff]
    %v98 = vld [vmem:[%s1 + $0x1c8] sm:$0xff]
    %v99 = vld [vmem:[%s1 + $0x1d0] sm:$0xff]
    %v100 = vld [vmem:[%s1 + $0x1d8] sm:$0xff]
    %v101 = vld [vmem:[%s1 + $0x1e0] sm:$0xff]
    %v102 = vld [vmem:[%s1 + $0x1e8] sm:$0xff]
    %v103 = vld [vmem:[%s1 + $0x1f0] sm:$0xff]
    %v104 = vld [vmem:[%s1 + $0x1f8] sm:$0xff]
    %v105 = vld [vmem:[%s1 + $0x200] sm:$0xff]
    %v106 = vld [vmem:[%s1 + $0x208] sm:$0xff]
    %v107 = vld [vmem:[%s1 + $0x210] sm:$0xff]
    %v108 = vld [vmem:[%s1 + $0x218] sm:$0xff]
    %v109 = vld [vmem:[%s1 + $0x220] sm:$0xff]
    %v110 = vld [vmem:[%s1 + $0x228] sm:$0xff]
    %v111 = vld [vmem:[%s1 + $0x230] sm:$0xff]
    %v112 = vld [vmem:[%s1 + $0x238] sm:$0xff]
    %v113 = vld [vmem:[%s1 + $0x240] sm:$0xff]
    %v114 = vld [vmem:[%s1 + $0x248] sm:$0xff]
    %v115 = vld [vmem:[%s1 + $0x250] sm:$0xff]
    %v116 = vld [vmem:[%s1 + $0x258] sm:$0xff]
    %v117 = vld [vmem:[%s1 + $0x260] sm:$0xff]
    %v118 = vld [vmem:[%s1 + $0x268] sm:$0xff]
    %v119 = vld [vmem:[%s1 + $0x270] sm:$0xff]
    %v120 = vld [vmem:[%s1 + $0x278] sm:$0xff]
    %v121 = vld [vmem:[%s1 + $0x280] sm:$0xff]
    %v122 = vld [vmem:[%s1 + $0x288] sm:$0xff]
    %v123 = vld [vmem:[%s1 + $0x290] sm:$0xff]
    %v124 = vld [vmem:[%s1 + $0x298] sm:$0xff]
    %v125 = vld [vmem:[%s1 + $0x2a0] sm:$0xff]
    %v126 = vld [vmem:[%s1 + $0x2a8] sm:$0xff]
    %v127 = vld [vmem:[%s1 + $0x2b0] sm:$0xff]
    %v128 = vld [vmem:[%s1 + $0x2b8] sm:$0xff]
    %v129 = vld [vmem:[%s1 + $0x2c0] sm:$0xff]
    %v130 = vld [vmem:[%s1 + $0x2c8] sm:$0xff]
    %v131 = vld [vmem:[%s1 + $0x2d0] sm:$0xff]
    %v132 = vld [vmem:[%s1 + $0x2d8] sm:$0xff]
    %v133 = vld [vmem:[%s1 + $0x2e0] sm:$0xff]
    %v134 = vld [vmem:[%s1 + $0x2e8] sm:$0xff]
    %v135 = vld [vmem:[%s1 + $0x2f0] sm:$0xff]
    %v136 = vld [vmem:[%s1 + $0x2f8] sm:$0xff]
    %v137 = vld [vmem:[%s1 + $0x300] sm:$0xff]
    %v138 = vld [vmem:[%s1 + $0x308] sm:$0xff]
    %v139 = vld [vmem:[%s1 + $0x310] sm:$0xff]
    %v140 = vld [vmem:[%s1 + $0x318] sm:$0xff]
    %v141 = vld [vmem:[%s1 + $0x320] sm:$0xff]
    %v142 = vld [vmem:[%s1 + $0x328] sm:$0xff]
    %v143 = vld [vmem:[%s1 + $0x330] sm:$0xff]
    %v144 = vld [vmem:[%s1 + $0x338] sm:$0xff]
    %v145 = vld [vmem:[%s1 + $0x340] sm:$0xff]
    %v146 = vld [vmem:[%s1 + $0x348] sm:$0xff]
    %v147 = vld [vmem:[%s1 + $0x350] sm:$0xff]
    %v148 = vld [vmem:[%s1 + $0x358] sm:$0xff]
    %v149 = vld [vmem:[%s1 + $0x360] sm:$0xff]
    %v150 = vld [vmem:[%s1 + $0x368] sm:$0xff]
    %v151 = vld [vmem:[%s1 + $0x370] sm:$0xff]
    %v152 = vld [vmem:[%s1 + $0x378] sm:$0xff]
    %v153 = vld [vmem:[%s1 + $0x380] sm:$0xff]
    %v154 = vld [vmem:[%s1 + $0x388] sm:$0xff]
    %v155 = vld [vmem:[%s1 + $0x390] sm:$0xff]
    %v156 = vld [vmem:[%s1 + $0x398] sm:$0xff]
    %v157 = vld [vmem:[%s1 + $0x3a0] sm:$0xff]
    %v158 = vld [vmem:[%s1 + $0x3a8] sm:$0xff]
    %v159 = vld [vmem:[%s1 + $0x3b0] sm:$0xff]
    %v160 = vld [vmem:[%s1 + $0x3b8] sm:$0xff]
    %v161 = vld [vmem:[%s1 + $0x3c0] sm:$0xff]
    %v162 = vld [vmem:[%s1 + $0x3c8] sm:$0xff]
    %v163 = vld [vmem:[%s1 + $0x3d0] sm:$0xff]
    %v164 = vld [vmem:[%s1 + $0x3d8] sm:$0xff]
    %v165 = vld [vmem:[%s1 + $0x3e0] sm:$0xff]
    %v166 = vld [vmem:[%s1 + $0x3e8] sm:$0xff]
    %v167 = vld [vmem:[%s1 + $0x3f0] sm:$0xff]
    %v168 = vld [vmem:[%s1 + $0x3f8] sm:$0xff]
    %v169 = vld [vmem:[%s1 + $0x400] sm:$0xff]
    %v170 = vld [vmem:[%s1 + $0x408] sm:$0xff]
    %v171 = vld [vmem:[%s1 + $0x410] sm:$0xff]
    %v172 = vld [vmem:[%s1 + $0x418] sm:$0xff]
    %v173 = vld [vmem:[%s1 + $0x420] sm:$0xff]
    %v174 = vld [vmem:[%s1 + $0x428] sm:$0xff]
    %v175 = vld [vmem:[%s1 + $0x430] sm:$0xff]
    %v176 = vld [vmem:[%s1 + $0x438] sm:$0xff]
    %v177 = vld [vmem:[%s1 + $0x440] sm:$0xff]
    %v178 = vld [vmem:[%s1 + $0x448] sm:$0xff]
    %v179 = vld [vmem:[%s1 + $0x450] sm:$0xff]
    %v180 = vld [vmem:[%s1 + $0x458] sm:$0xff]
    %v181 = vld [vmem:[%s1 + $0x460] sm:$0xff]
    %v182 = vld [vmem:[%s1 + $0x468] sm:$0xff]
    %v183 = vld [vmem:[%s1 + $0x470] sm:$0xff]
    %v184 = vld [vmem:[%s1 + $0x478] sm:$0xff]
    %v185 = vld [vmem:[%s1 + $0x480] sm:$0xff]
    %v186 = vld [vmem:[%s1 + $0x488] sm:$0xff]
    %v187 = vld [vmem:[%s1 + $0x490] sm:$0xff]
    %v188 = vld [vmem:[%s1 + $0x498] sm:$0xff]
    %v189 = vld [vmem:[%s1 + $0x4a0] sm:$0xff]
    %v190 = vld [vmem:[%s1 + $0x4a8] sm:$0xff]
    %v191 = vld [vmem:[%s1 + $0x4b0] sm:$0xff]
    %v192 = vld [vmem:[%s1 + $0x4b8] sm:$0xff]
    %v193 = vld [vmem:[%s1 + $0x4c0] sm:$0xff]
    %v194 = vld [vmem:[%s1 + $0x4c8] sm:$0xff]
    %v195 = vld [vmem:[%s1 + $0x4d0] sm:$0xff]
    %v196 = vld [vmem:[%s1 + $0x4d8] sm:$0xff]
    %v197 = vld [vmem:[%s1 + $0x4e0] sm:$0xff]
    %v198 = vld [vmem:[%s1 + $0x4e8] sm:$0xff]
    %v199 = vld [vmem:[%s1 + $0x4f0] sm:$0xff]
    %v200 = vld [vmem:[%s1 + $0x4f8] sm:$0xff]
    %v201 = vld [vmem:[%s1 + $0x500] sm:$0xff]
    %v202 = vld [vmem:[%s1 + $0x508] sm:$0xff]
    %v203 = vld [vmem:[%s1 + $0x510] sm:$0xff]
    %v204 = vld [vmem:[%s1 + $0x518] sm:$0xff]
    %v205 = vld [vmem:[%s1 + $0x520] sm:$0xff]
    %v206 = vld [vmem:[%s1 + $0x528] sm:$0xff]
    %v207 = vld [vmem:[%s1 + $0x530] sm:$0xff]
    %v208 = vld [vmem:[%s1 + $0x538] sm:$0xff]
    %v209 = vld [vmem:[%s1 + $0x540] sm:$0xff]
    %v210 = vld [vmem:[%s1 + $0x548] sm:$0xff]
    %v211 = vld [vmem:[%s1 + $0x550] sm:$0xff]
    %v212 = vld [vmem:[%s1 + $0x558] sm:$0xff]
    %v213 = vld [vmem:[%s1 + $0x560] sm:$0xff]
    %v214 = vld [vmem:[%s1 + $0x568] sm:$0xff]
    %v215 = vld [vmem:[%s1 + $0x570] sm:$0xff]
    %v216 = vld [vmem:[%s1 + $0x578] sm:$0xff]
    %v217 = vld [vmem:[%s1 + $0x580] sm:$0xff]
    %v218 = vld [vmem:[%s1 + $0x588] sm:$0xff]
    %v219 = vld [vmem:[%s1 + $0x590] sm:$0xff]
    %v220 = vld [vmem:[%s1 + $0x598] sm:$0xff]
    %v221 = vld [vmem:[%s1 + $0x5a0] sm:$0xff]
    %v222 = vld [vmem:[%s1 + $0x5a8] sm:$0xff]
    %v223 = vld [vmem:[%s1 + $0x5b0] sm:$0xff]
    %v224 = vld [vmem:[%s1 + $0x5b8] sm:$0xff]
    %v225 = vld [vmem:[%s1 + $0x5c0] sm:$0xff]
    %v226 = vld [vmem:[%s1 + $0x5c8] sm:$0xff]
    %v227 = vld [vmem:[%s1 + $0x5d0] sm:$0xff]
    %v228 = vld [vmem:[%s1 + $0x5d8] sm:$0xff]
    %v229 = vld [vmem:[%s1 + $0x5e0] sm:$0xff]
    %v230 = vld [vmem:[%s1 + $0x5e8] sm:$0xff]
    %v231 = vld [vmem:[%s1 + $0x5f0] sm:$0xff]
    %v232 = vld [vmem:[%s1 + $0x5f8] sm:$0xff]
    %v233 = vld [vmem:[%s1 + $0x600] sm:$0xff]
    %v234 = vld [vmem:[%s1 + $0x608] sm:$0xff]
    %v235 = vld [vmem:[%s1 + $0x610] sm:$0xff]
    %v236 = vld [vmem:[%s1 + $0x618] sm:$0xff]
    %v237 = vld [vmem:[%s1 + $0x620] sm:$0xff]
    %v238 = vld [vmem:[%s1 + $0x628] sm:$0xff]
    %v239 = vld [vmem:[%s1 + $0x630] sm:$0xff]
    %v240 = vld [vmem:[%s1 + $0x638] sm:$0xff]
    %v241 = vld [vmem:[%s1 + $0x640] sm:$0xff]
    %v242 = vld [vmem:[%s1 + $0x648] sm:$0xff]
    %v243 = vld [vmem:[%s1 + $0x650] sm:$0xff]
    %v244 = vld [vmem:[%s1 + $0x658] sm:$0xff]
    %v245 = vld [vmem:[%s1 + $0x660] sm:$0xff]
    %v246 = vld [vmem:[%s1 + $0x668] sm:$0xff]
    %v247 = vld [vmem:[%s1 + $0x670] sm:$0xff]
    %v248 = vld [vmem:[%s1 + $0x678] sm:$0xff]
    %v249 = vld [vmem:[%s1 + $0x680] sm:$0xff]
    %v250 = vld [vmem:[%s1 + $0x688] sm:$0xff]
    %v251 = vld [vmem:[%s1 + $0x690] sm:$0xff]
    %v252 = vld [vmem:[%s1 + $0x698] sm:$0xff]
    %v253 = vld [vmem:[%s1 + $0x6a0] sm:$0xff]
    %v254 = vld [vmem:[%s1 + $0x6a8] sm:$0xff]
    %v255 = vld [vmem:[%s1 + $0x6b0] sm:$0xff]
    %v256 = vld [vmem:[%s1 + $0x6b8] sm:$0xff]
    %v257 = vld [vmem:[%s1 + $0x6c0] sm:$0xff]
    %v258 = vld [vmem:[%s1 + $0x6c8] sm:$0xff]
    %v259 = vld [vmem:[%s1 + $0x6d0] sm:$0xff]
    %v260 = vld [vmem:[%s1 + $0x6d8] sm:$0xff]
    %v261 = vld [vmem:[%s1 + $0x6e0] sm:$0xff]
    %v262 = vld [vmem:[%s1 + $0x6e8] sm:$0xff]
    %v263 = vld [vmem:[%s1 + $0x6f0] sm:$0xff]
    %v264 = vld [vmem:[%s1 + $0x6f8] sm:$0xff]
    %v265 = vld [vmem:[%s1 + $0x700] sm:$0xff]
    %v266 = vld [vmem:[%s1 + $0x708] sm:$0xff]
    %v267 = vld [vmem:[%s1 + $0x710] sm:$0xff]
    %v268 = vld [vmem:[%s1 + $0x718] sm:$0xff]
    %v269 = vld [vmem:[%s1 + $0x720] sm:$0xff]
    %v270 = vld [vmem:[%s1 + $0x728] sm:$0xff]
    %v271 = vld [vmem:[%s1 + $0x730] sm:$0xff]
    %v272 = vld [vmem:[%s1 + $0x738] sm:$0xff]
    %v273 = vld [vmem:[%s1 + $0x740] sm:$0xff]
    %v274 = vld [vmem:[%s1 + $0x748] sm:$0xff]
    %v275 = vld [vmem:[%s1 + $0x750] sm:$0xff]
    %v276 = vld [vmem:[%s1 + $0x758] sm:$0xff]
    %v277 = vld [vmem:[%s1 + $0x760] sm:$0xff]
    %v278 = vld [vmem:[%s1 + $0x768] sm:$0xff]
    %v279 = vld [vmem:[%s1 + $0x770] sm:$0xff]
    %v280 = vld [vmem:[%s1 + $0x778] sm:$0xff]
    %v281 = vld [vmem:[%s1 + $0x780] sm:$0xff]
    %v282 = vld [vmem:[%s1 + $0x788] sm:$0xff]
    %v283 = vld [vmem:[%s1 + $0x790] sm:$0xff]
    %v284 = vld [vmem:[%s1 + $0x798] sm:$0xff]
    %v285 = vld [vmem:[%s1 + $0x7a0] sm:$0xff]
    %v286 = vld [vmem:[%s1 + $0x7a8] sm:$0xff]
    %v287 = vld [vmem:[%s1 + $0x7b0] sm:$0xff]
    %v288 = vld [vmem:[%s1 + $0x7b8] sm:$0xff]
    %v289 = vld [vmem:[%s1 + $0x7c0] sm:$0xff]
    %v290 = vld [vmem:[%s1 + $0x7c8] sm:$0xff]
    %v291 = vld [vmem:[%s1 + $0x7d0] sm:$0xff]
    %v292 = vld [vmem:[%s1 + $0x7d8] sm:$0xff]
    %v293 = vld [vmem:[%s1 + $0x7e0] sm:$0xff]
    %v294 = vld [vmem:[%s1 + $0x7e8] sm:$0xff]
    %v295 = vld [vmem:[%s1 + $0x7f0] sm:$0xff]
    %v296 = vld [vmem:[%s1 + $0x7f8] sm:$0xff]
    %v297 = vld [vmem:[%s1 + $0x800] sm:$0xff]
    %v298 = vld [vmem:[%s1 + $0x808] sm:$0xff]
    %v299 = vld [vmem:[%s1 + $0x810] sm:$0xff]
    %v300 = vld [vmem:[%s1 + $0x818] sm:$0xff]
    %v301 = vld [vmem:[%s1 + $0x820] sm:$0xff]
    %v302 = vld [vmem:[%s1 + $0x828] sm:$0xff]
    %v303 = vld [vmem:[%s1 + $0x830] sm:$0xff]
    %v304 = vld [vmem:[%s1 + $0x838] sm:$0xff]
    %v305 = vld [vmem:[%s1 + $0x840] sm:$0xff]
    %v306 = vld [vmem:[%s1 + $0x848] sm:$0xff]
    %v307 = vld [vmem:[%s1 + $0x850] sm:$0xff]
    %v308 = vld [vmem:[%s1 + $0x858] sm:$0xff]
    %v309 = vld [vmem:[%s1 + $0x860] sm:$0xff]
    %v310 = vld [vmem:[%s1 + $0x868] sm:$0xff]
    %v311 = vld [vmem:[%s1 + $0x870] sm:$0xff]
    %v312 = vld [vmem:[%s1 + $0x878] sm:$0xff]
    %v313 = vld [vmem:[%s1 + $0x880] sm:$0xff]
    %v314 = vld [vmem:[%s1 + $0x888] sm:$0xff]
    %v315 = vld [vmem:[%s1 + $0x890] sm:$0xff]
    %v316 = vld [vmem:[%s1 + $0x898] sm:$0xff]
    %v317 = vld [vmem:[%s1 + $0x8a0] sm:$0xff]
    %v318 = vld [vmem:[%s1 + $0x8a8] sm:$0xff]
    %v319 = vld [vmem:[%s1 + $0x8b0] sm:$0xff]
    %v320 = vld [vmem:[%s1 + $0x8b8] sm:$0xff]
    %v321 = vld [vmem:[%s1 + $0x8c0] sm:$0xff]
    %v322 = vld [vmem:[%s1 + $0x8c8] sm:$0xff]
    %v323 = vld [vmem:[%s1 + $0x8d0] sm:$0xff]
    %v324 = vld [vmem:[%s1 + $0x8d8] sm:$0xff]
    %v325 = vld [vmem:[%s1 + $0x8e0] sm:$0xff]
    %v326 = vld [vmem:[%s1 + $0x8e8] sm:$0xff]
    %v327 = vld [vmem:[%s1 + $0x8f0] sm:$0xff]
    %v328 = vld [vmem:[%s1 + $0x8f8] sm:$0xff]
    %v329 = vld [vmem:[%s1 + $0x900] sm:$0xff]
    %v330 = vld [vmem:[%s1 + $0x908] sm:$0xff]
    %v331 = vld [vmem:[%s1 + $0x910] sm:$0xff]
    %v332 = vld [vmem:[%s1 + $0x918] sm:$0xff]
    %v333 = vld [vmem:[%s1 + $0x920] sm:$0xff]
    %v334 = vld [vmem:[%s1 + $0x928] sm:$0xff]
    %v335 = vld [vmem:[%s1 + $0x930] sm:$0xff]
    %v336 = vld [vmem:[%s1 + $0x938] sm:$0xff]
    %v337 = vld [vmem:[%s1 + $0x940] sm:$0xff]
    %v338 = vld [vmem:[%s1 + $0x948] sm:$0xff]
    %v339 = vld [vmem:[%s1 + $0x950] sm:$0xff]
    %v340 = vld [vmem:[%s1 + $0x958] sm:$0xff]
    %v341 = vld [vmem:[%s1 + $0x960] sm:$0xff]
    %v342 = vld [vmem:[%s1 + $0x968] sm:$0xff]
    %v343 = vld [vmem:[%s1 + $0x970] sm:$0xff]
    %v344 = vld [vmem:[%s1 + $0x978] sm:$0xff]
    %v345 = vld [vmem:[%s1 + $0x980] sm:$0xff]
    %v346 = vld [vmem:[%s1 + $0x988] sm:$0xff]
    %v347 = vld [vmem:[%s1 + $0x990] sm:$0xff]
    %v348 = vld [vmem:[%s1 + $0x998] sm:$0xff]
    %v349 = vld [vmem:[%s1 + $0x9a0] sm:$0xff]
    %v350 = vld [vmem:[%s1 + $0x9a8] sm:$0xff]
    %v351 = vld [vmem:[%s1 + $0x9b0] sm:$0xff]
    %v352 = vld [vmem:[%s1 + $0x9b8] sm:$0xff]
    %v353 = vld [vmem:[%s1 + $0x9c0] sm:$0xff]
    %v354 = vld [vmem:[%s1 + $0x9c8] sm:$0xff]
    %v355 = vld [vmem:[%s1 + $0x9d0] sm:$0xff]
    %v356 = vld [vmem:[%s1 + $0x9d8] sm:$0xff]
    %v357 = vld [vmem:[%s1 + $0x9e0] sm:$0xff]
    %v358 = vld [vmem:[%s1 + $0x9e8] sm:$0xff]
    %v359 = vld [vmem:[%s1 + $0x9f0] sm:$0xff]
    %v360 = vld [vmem:[%s1 + $0x9f8] sm:$0xff]
    %v361 = vld [vmem:[%s1 + $0xa00] sm:$0xff]
    %v362 = vld [vmem:[%s1 + $0xa08] sm:$0xff]
    %v363 = vld [vmem:[%s1 + $0xa10] sm:$0xff]
    %v364 = vld [vmem:[%s1 + $0xa18] sm:$0xff]
    %v365 = vld [vmem:[%s1 + $0xa20] sm:$0xff]
    %v366 = vld [vmem:[%s1 + $0xa28] sm:$0xff]
    %v367 = vld [vmem:[%s1 + $0xa30] sm:$0xff]
    %v368 = vld [vmem:[%s1 + $0xa38] sm:$0xff]
    %v369 = vld [vmem:[%s1 + $0xa40] sm:$0xff]
    %v370 = vld [vmem:[%s1 + $0xa48] sm:$0xff]
    %v371 = vld [vmem:[%s1 + $0xa50] sm:$0xff]
    %v372 = vld [vmem:[%s1 + $0xa58] sm:$0xff]
    %v373 = vld [vmem:[%s1 + $0xa60] sm:$0xff]
    %v374 = vld [vmem:[%s1 + $0xa68] sm:$0xff]
    %v375 = vld [vmem:[%s1 + $0xa70] sm:$0xff]
    %v376 = vld [vmem:[%s1 + $0xa78] sm:$0xff]
    %v377 = vld [vmem:[%s1 + $0xa80] sm:$0xff]
    %v378 = vld [vmem:[%s1 + $0xa88] sm:$0xff]
    %v379 = vld [vmem:[%s1 + $0xa90] sm:$0xff]
    %v380 = vld [vmem:[%s1 + $0xa98] sm:$0xff]
    %v381 = vld [vmem:[%s1 + $0xaa0] sm:$0xff]
    %v382 = vld [vmem:[%s1 + $0xaa8] sm:$0xff]
    %v383 = vld [vmem:[%s1 + $0xab0] sm:$0xff]
    %v384 = vld [vmem:[%s1 + $0xab8] sm:$0xff]
    %v385 = vld [vmem:[%s1 + $0xac0] sm:$0xff]
    %v386 = vld [vmem:[%s1 + $0xac8] sm:$0xff]
    %v387 = vld [vmem:[%s1 + $0xad0] sm:$0xff]
    %v388 = vld [vmem:[%s1 + $0xad8] sm:$0xff]
    %v389 = vld [vmem:[%s1 + $0xae0] sm:$0xff]
    %v390 = vld [vmem:[%s1 + $0xae8] sm:$0xff]
    %v391 = vld [vmem:[%s1 + $0xaf0] sm:$0xff]
    %v392 = vld [vmem:[%s1 + $0xaf8] sm:$0xff]
    %v393 = vld [vmem:[%s1 + $0xb00] sm:$0xff]
    %v394 = vld [vmem:[%s1 + $0xb08] sm:$0xff]
    %v395 = vld [vmem:[%s1 + $0xb10] sm:$0xff]
    %v396 = vld [vmem:[%s1 + $0xb18] sm:$0xff]
    %v397 = vld [vmem:[%s1 + $0xb20] sm:$0xff]
    %v398 = vld [vmem:[%s1 + $0xb28] sm:$0xff]
    %v399 = vld [vmem:[%s1 + $0xb30] sm:$0xff]
    %v400 = vld [vmem:[%s1 + $0xb38] sm:$0xff]
    %v401 = vld [vmem:[%s1 + $0xb40] sm:$0xff]
    %v402 = vld [vmem:[%s1 + $0xb48] sm:$0xff]
    %v403 = vld [vmem:[%s1 + $0xb50] sm:$0xff]
    %v404 = vld [vmem:[%s1 + $0xb58] sm:$0xff]
    %v405 = vld [vmem:[%s1 + $0xb60] sm:$0xff]
    %v406 = vld [vmem:[%s1 + $0xb68] sm:$0xff]
    %v407 = vld [vmem:[%s1 + $0xb70] sm:$0xff]
    %v408 = vld [vmem:[%s1 + $0xb78] sm:$0xff]
    %v409 = vld [vmem:[%s1 + $0xb80] sm:$0xff]
    %v410 = vld [vmem:[%s1 + $0xb88] sm:$0xff]
    %v411 = vld [vmem:[%s1 + $0xb90] sm:$0xff]
    %v412 = vld [vmem:[%s1 + $0xb98] sm:$0xff]
    %v413 = vld [vmem:[%s1 + $0xba0] sm:$0xff]
    %v414 = vld [vmem:[%s1 + $0xba8] sm:$0xff]
    %v415 = vld [vmem:[%s1 + $0xbb0] sm:$0xff]
    %v416 = vld [vmem:[%s1 + $0xbb8] sm:$0xff]
    %v417 = vld [vmem:[%s1 + $0xbc0] sm:$0xff]
    %v418 = vld [vmem:[%s1 + $0xbc8] sm:$0xff]
    %v419 = vld [vmem:[%s1 + $0xbd0] sm:$0xff]
    %v420 = vld [vmem:[%s1 + $0xbd8] sm:$0xff]
    %v421 = vld [vmem:[%s1 + $0xbe0] sm:$0xff]
    %v422 = vld [vmem:[%s1 + $0xbe8] sm:$0xff]
    %v423 = vld [vmem:[%s1 + $0xbf0] sm:$0xff]
    %v424 = vld [vmem:[%s1 + $0xbf8] sm:$0xff]
    %v425 = vld [vmem:[%s1 + $0xc00] sm:$0xff]
    %v426 = vld [vmem:[%s1 + $0xc08] sm:$0xff]
    %v427 = vld [vmem:[%s1 + $0xc10] sm:$0xff]
    %v428 = vld [vmem:[%s1 + $0xc18] sm:$0xff]
    %v429 = vld [vmem:[%s1 + $0xc20] sm:$0xff]
    %v430 = vld [vmem:[%s1 + $0xc28] sm:$0xff]
    %v431 = vld [vmem:[%s1 + $0xc30] sm:$0xff]
    %v432 = vld [vmem:[%s1 + $0xc38] sm:$0xff]
    %v433 = vld [vmem:[%s1 + $0xc40] sm:$0xff]
    %v434 = vld [vmem:[%s1 + $0xc48] sm:$0xff]
    %v435 = vld [vmem:[%s1 + $0xc50] sm:$0xff]
    %v436 = vld [vmem:[%s1 + $0xc58] sm:$0xff]
    %v437 = vld [vmem:[%s1 + $0xc60] sm:$0xff]
    %v438 = vld [vmem:[%s1 + $0xc68] sm:$0xff]
    %v439 = vld [vmem:[%s1 + $0xc70] sm:$0xff]
    %v440 = vld [vmem:[%s1 + $0xc78] sm:$0xff]
    %v441 = vld [vmem:[%s1 + $0xc80] sm:$0xff]
    %v442 = vld [vmem:[%s1 + $0xc88] sm:$0xff]
    %v443 = vld [vmem:[%s1 + $0xc90] sm:$0xff]
    %v444 = vld [vmem:[%s1 + $0xc98] sm:$0xff]
    %v445 = vld [vmem:[%s1 + $0xca0] sm:$0xff]
    %v446 = vld [vmem:[%s1 + $0xca8] sm:$0xff]
    %v447 = vld [vmem:[%s1 + $0xcb0] sm:$0xff]
    %v448 = vld [vmem:[%s1 + $0xcb8] sm:$0xff]
    %v449 = vld [vmem:[%s1 + $0xcc0] sm:$0xff]
    %v450 = vld [vmem:[%s1 + $0xcc8] sm:$0xff]
    %v451 = vld [vmem:[%s1 + $0xcd0] sm:$0xff]
    %v452 = vld [vmem:[%s1 + $0xcd8] sm:$0xff]
    %v453 = vld [vmem:[%s1 + $0xce0] sm:$0xff]
    %v454 = vld [vmem:[%s1 + $0xce8] sm:$0xff]
    %v455 = vld [vmem:[%s1 + $0xcf0] sm:$0xff]
    %v456 = vld [vmem:[%s1 + $0xcf8] sm:$0xff]
    %v457 = vld [vmem:[%s1 + $0xd00] sm:$0xff]
    %v458 = vld [vmem:[%s1 + $0xd08] sm:$0xff]
    %v459 = vld [vmem:[%s1 + $0xd10] sm:$0xff]
    %v460 = vld [vmem:[%s1 + $0xd18] sm:$0xff]
    %v461 = vld [vmem:[%s1 + $0xd20] sm:$0xff]
    %v462 = vld [vmem:[%s1 + $0xd28] sm:$0xff]
    %v463 = vld [vmem:[%s1 + $0xd30] sm:$0xff]
    %v464 = vld [vmem:[%s1 + $0xd38] sm:$0xff]
    %v465 = vld [vmem:[%s1 + $0xd40] sm:$0xff]
    %v466 = vld [vmem:[%s1 + $0xd48] sm:$0xff]
    %v467 = vld [vmem:[%s1 + $0xd50] sm:$0xff]
    %v468 = vld [vmem:[%s1 + $0xd58] sm:$0xff]
    %v469 = vld [vmem:[%s1 + $0xd60] sm:$0xff]
    %v470 = vld [vmem:[%s1 + $0xd68] sm:$0xff]
    %v471 = vld [vmem:[%s1 + $0xd70] sm:$0xff]
    %v472 = vld [vmem:[%s1 + $0xd78] sm:$0xff]
    %v473 = vld [vmem:[%s1 + $0xd80] sm:$0xff]
    %v474 = vld [vmem:[%s1 + $0xd88] sm:$0xff]
    %v475 = vld [vmem:[%s1 + $0xd90] sm:$0xff]
    %v476 = vld [vmem:[%s1 + $0xd98] sm:$0xff]
    %v477 = vld [vmem:[%s1 + $0xda0] sm:$0xff]
    %v478 = vld [vmem:[%s1 + $0xda8] sm:$0xff]
    %v479 = vld [vmem:[%s1 + $0xdb0] sm:$0xff]
    %v480 = vld [vmem:[%s1 + $0xdb8] sm:$0xff]
    %v481 = vld [vmem:[%s1 + $0xdc0] sm:$0xff]
    %v482 = vld [vmem:[%s1 + $0xdc8] sm:$0xff]
    %v483 = vld [vmem:[%s1 + $0xdd0] sm:$0xff]
    %v484 = vld [vmem:[%s1 + $0xdd8] sm:$0xff]
    %v485 = vld [vmem:[%s1 + $0xde0] sm:$0xff]
    %v486 = vld [vmem:[%s1 + $0xde8] sm:$0xff]
    %v487 = vld [vmem:[%s1 + $0xdf0] sm:$0xff]
    %v488 = vld [vmem:[%s1 + $0xdf8] sm:$0xff]
    %v489 = vld [vmem:[%s1 + $0xe00] sm:$0xff]
    %v490 = vld [vmem:[%s1 + $0xe08] sm:$0xff]
    %v491 = vld [vmem:[%s2] sm:$0x1]
    %v493 = vlaneseq
    %v494 = vshrl.u32 %v493, 7
    %v495 = vsub.s32 0, %v494
    %v496 = vrot.slane %v491, %v495
    %v506 = vcombine.high %v33, %v33
    %v508 = vunpack.c.l.s4 1983009808
    %v509 = vunpack.c.0.s8 %v508
    %v510 = vlaneseq
    %v511 = vshrl.u32 %v510, 7
    %v512 = vsub.s32 %v509, %v511
    %v513 = vrot.slane %v33, %v512
    %v515 = vunpack.c.l.s4 1983009808
    %v516 = vunpack.c.0.s8 %v515
    %v517 = vlaneseq
    %v518 = vshrl.u32 %v517, 7
    %v519 = vsub.s32 %v516, %v518
    %v520 = vrot.slane %v506, %v519
    %v521 = vcombine.high %v513, %v513
    %v522 = vcombine.high %v520, %v520
    %v523 = vcombine.high %v34, %v34
    %v525 = vunpack.c.l.s4 1983009808
    %v526 = vunpack.c.0.s8 %v525
    %v527 = vlaneseq
    %v528 = vshrl.u32 %v527, 7
    %v529 = vsub.s32 %v526, %v528
    %v530 = vrot.slane %v34, %v529
    %v532 = vunpack.c.l.s4 1983009808
    %v533 = vunpack.c.0.s8 %v532
    %v534 = vlaneseq
    %v535 = vshrl.u32 %v534, 7
    %v536 = vsub.s32 %v533, %v535
    %v537 = vrot.slane %v523, %v536
    %v538 = vcombine.high %v530, %v530
    %v539 = vcombine.high %v537, %v537
    %v540 = vcombine.high %v35, %v35
    %v542 = vunpack.c.l.s4 1983009808
    %v543 = vunpack.c.0.s8 %v542
    %v544 = vlaneseq
    %v545 = vshrl.u32 %v544, 7
    %v546 = vsub.s32 %v543, %v545
    %v547 = vrot.slane %v35, %v546
    %v549 = vunpack.c.l.s4 1983009808
    %v550 = vunpack.c.0.s8 %v549
    %v551 = vlaneseq
    %v552 = vshrl.u32 %v551, 7
    %v553 = vsub.s32 %v550, %v552
    %v554 = vrot.slane %v540, %v553
    %v555 = vcombine.high %v547, %v547
    %v556 = vcombine.high %v554, %v554
    %v557 = vcombine.high %v36, %v36
    %v559 = vunpack.c.l.s4 1983009808
    %v560 = vunpack.c.0.s8 %v559
    %v561 = vlaneseq
    %v562 = vshrl.u32 %v561, 7
    %v563 = vsub.s32 %v560, %v562
    %v564 = vrot.slane %v36, %v563
    %v566 = vunpack.c.l.s4 1983009808
    %v567 = vunpack.c.0.s8 %v566
    %v568 = vlaneseq
    %v569 = vshrl.u32 %v568, 7
    %v570 = vsub.s32 %v567, %v569
    %v571 = vrot.slane %v557, %v570
    %v572 = vcombine.high %v564, %v564
    %v573 = vcombine.high %v571, %v571
    %v574 = vcombine.high %v37, %v37
    %v576 = vunpack.c.l.s4 1983009808
    %v577 = vunpack.c.0.s8 %v576
    %v578 = vlaneseq
    %v579 = vshrl.u32 %v578, 7
    %v580 = vsub.s32 %v577, %v579
    %v581 = vrot.slane %v37, %v580
    %v583 = vunpack.c.l.s4 1983009808
    %v584 = vunpack.c.0.s8 %v583
    %v585 = vlaneseq
    %v586 = vshrl.u32 %v585, 7
    %v587 = vsub.s32 %v584, %v586
    %v588 = vrot.slane %v574, %v587
    %v589 = vcombine.high %v581, %v581
    %v590 = vcombine.high %v588, %v588
    %v591 = vcombine.high %v38, %v38
    %v593 = vunpack.c.l.s4 1983009808
    %v594 = vunpack.c.0.s8 %v593
    %v595 = vlaneseq
    %v596 = vshrl.u32 %v595, 7
    %v597 = vsub.s32 %v594, %v596
    %v598 = vrot.slane %v38, %v597
    %v600 = vunpack.c.l.s4 1983009808
    %v601 = vunpack.c.0.s8 %v600
    %v602 = vlaneseq
    %v603 = vshrl.u32 %v602, 7
    %v604 = vsub.s32 %v601, %v603
    %v605 = vrot.slane %v591, %v604
    %v606 = vcombine.high %v598, %v598
    %v607 = vcombine.high %v605, %v605
    %v608 = vcombine.high %v39, %v39
    %v610 = vunpack.c.l.s4 1983009808
    %v611 = vunpack.c.0.s8 %v610
    %v612 = vlaneseq
    %v613 = vshrl.u32 %v612, 7
    %v614 = vsub.s32 %v611, %v613
    %v615 = vrot.slane %v39, %v614
    %v617 = vunpack.c.l.s4 1983009808
    %v618 = vunpack.c.0.s8 %v617
    %v619 = vlaneseq
    %v620 = vshrl.u32 %v619, 7
    %v621 = vsub.s32 %v618, %v620
    %v622 = vrot.slane %v608, %v621
    %v623 = vcombine.high %v615, %v615
    %v624 = vcombine.high %v622, %v622
    %v626 = vunpack.c.l.s4 1983009808
    %v627 = vunpack.c.0.s8 %v626
    %v628 = vlaneseq
    %v629 = vshrl.u32 %v628, 7
    %v630 = vsub.s32 %v627, %v629
    %v631 = vrot.slane %v40, %v630
    %vm660 = vcmask 130048
    %v661 = vsel %vm660, %v631, 0
    %663 = vmatprep.subr.mxu0 0.0
    %664 = vmatpush1.msra.mxu0 %v56
    %665 = vmatprep.subr.mxu0 0.0
    %666 = vmatpush1.msra.mxu0 %v55
    %667 = vmatprep.subr.mxu0 0.0
    %668 = vmatpush1.msra.mxu0 %v54
    %669 = vmatprep.subr.mxu0 0.0
    %670 = vmatpush1.msra.mxu0 %v53
    %671 = vmatprep.subr.mxu0 0.0
    %672 = vmatpush1.msra.mxu0 %v52
    %673 = vmatprep.subr.mxu0 0.0
    %674 = vmatpush1.msra.mxu0 %v51
    %675 = vmatprep.subr.mxu0 0.0
    %676 = vmatpush1.msra.mxu0 %v50
    %677 = vmatprep.subr.mxu0 0.0
    %678 = vmatpush1.msra.mxu0 %v49
    %679 = vmatprep.subr.mxu0 0.0
    %680 = vmatpush1.msra.mxu0 %v48
    %681 = vmatprep.subr.mxu0 0.0
    %682 = vmatpush1.msra.mxu0 %v47
    %683 = vmatprep.subr.mxu0 0.0
    %684 = vmatpush1.msra.mxu0 %v46
    %685 = vmatprep.subr.mxu0 0.0
    %686 = vmatpush1.msra.mxu0 %v45
    %687 = vmatprep.subr.mxu0 0.0
    %688 = vmatpush1.msra.mxu0 %v44
    %689 = vmatprep.subr.mxu0 0.0
    %690 = vmatpush1.msra.mxu0 %v43
    %691 = vmatprep.subr.mxu0 0.0
    %692 = vmatpush1.msra.mxu0 %v42
    %693 = vmatprep.subr.mxu0 0.0
    %694 = vmatpush1.msra.mxu0 %v41
    %695 = vmatprep.subr.mxu0 0.0
    %696 = vmatpush2.msra.mxu0 %v72
    %697 = vmatprep.subr.mxu0 0.0
    %698 = vmatpush2.msra.mxu0 %v71
    %699 = vmatprep.subr.mxu0 0.0
    %700 = vmatpush2.msra.mxu0 %v70
    %701 = vmatprep.subr.mxu0 0.0
    %702 = vmatpush2.msra.mxu0 %v69
    %703 = vmatprep.subr.mxu0 0.0
    %704 = vmatpush2.msra.mxu0 %v68
    %705 = vmatprep.subr.mxu0 0.0
    %706 = vmatpush2.msra.mxu0 %v67
    %707 = vmatprep.subr.mxu0 0.0
    %708 = vmatpush2.msra.mxu0 %v66
    %709 = vmatprep.subr.mxu0 0.0
    %710 = vmatpush2.msra.mxu0 %v65
    %711 = vmatprep.subr.mxu0 0.0
    %712 = vmatpush2.msra.mxu0 %v64
    %713 = vmatprep.subr.mxu0 0.0
    %714 = vmatpush2.msra.mxu0 %v63
    %715 = vmatprep.subr.mxu0 0.0
    %716 = vmatpush2.msra.mxu0 %v62
    %717 = vmatprep.subr.mxu0 0.0
    %718 = vmatpush2.msra.mxu0 %v61
    %719 = vmatprep.subr.mxu0 0.0
    %720 = vmatpush2.msra.mxu0 %v60
    %721 = vmatprep.subr.mxu0 0.0
    %722 = vmatpush2.msra.mxu0 %v59
    %723 = vmatprep.subr.mxu0 0.0
    %724 = vmatpush2.msra.mxu0 %v58
    %725 = vmatprep.subr.mxu0 0.0
    %726 = vmatpush2.msra.mxu0 %v57
    %727 = vmatprep.mubr.f32.mxu0 %v521
    %728 = vmatmul.mubr.f32.gmra.mxu0 %v513
    %v729 = vpop.f32.mrf.mxu0
    %v730 = vadd.f32 %v496, %v729
    %v731 = vpop.f32.mrf.mxu0
    %732 = vdwg.mxu0
    %733 = vmatprep.subr.mxu0 0.0
    %734 = vmatpush1.msra.mxu0 %v88
    %735 = vmatprep.subr.mxu0 0.0
    %736 = vmatpush1.msra.mxu0 %v87
    %737 = vmatprep.subr.mxu0 0.0
    %738 = vmatpush1.msra.mxu0 %v86
    %739 = vmatprep.subr.mxu0 0.0
    %740 = vmatpush1.msra.mxu0 %v85
    %741 = vmatprep.subr.mxu0 0.0
    %742 = vmatpush1.msra.mxu0 %v84
    %743 = vmatprep.subr.mxu0 0.0
    %744 = vmatpush1.msra.mxu0 %v83
    %745 = vmatprep.subr.mxu0 0.0
    %746 = vmatpush1.msra.mxu0 %v82
    %747 = vmatprep.subr.mxu0 0.0
    %748 = vmatpush1.msra.mxu0 %v81
    %749 = vmatprep.subr.mxu0 0.0
    %750 = vmatpush1.msra.mxu0 %v80
    %751 = vmatprep.subr.mxu0 0.0
    %752 = vmatpush1.msra.mxu0 %v79
    %753 = vmatprep.subr.mxu0 0.0
    %754 = vmatpush1.msra.mxu0 %v78
    %755 = vmatprep.subr.mxu0 0.0
    %756 = vmatpush1.msra.mxu0 %v77
    %757 = vmatprep.subr.mxu0 0.0
    %758 = vmatpush1.msra.mxu0 %v76
    %759 = vmatprep.subr.mxu0 0.0
    %760 = vmatpush1.msra.mxu0 %v75
    %761 = vmatprep.subr.mxu0 0.0
    %762 = vmatpush1.msra.mxu0 %v74
    %763 = vmatprep.subr.mxu0 0.0
    %764 = vmatpush1.msra.mxu0 %v73
    %765 = vmatprep.subr.mxu0 0.0
    %766 = vmatpush2.msra.mxu0 %v104
    %767 = vmatprep.subr.mxu0 0.0
    %768 = vmatpush2.msra.mxu0 %v103
    %769 = vmatprep.subr.mxu0 0.0
    %770 = vmatpush2.msra.mxu0 %v102
    %771 = vmatprep.subr.mxu0 0.0
    %772 = vmatpush2.msra.mxu0 %v101
    %773 = vmatprep.subr.mxu0 0.0
    %774 = vmatpush2.msra.mxu0 %v100
    %775 = vmatprep.subr.mxu0 0.0
    %776 = vmatpush2.msra.mxu0 %v99
    %777 = vmatprep.subr.mxu0 0.0
    %778 = vmatpush2.msra.mxu0 %v98
    %779 = vmatprep.subr.mxu0 0.0
    %780 = vmatpush2.msra.mxu0 %v97
    %781 = vmatprep.subr.mxu0 0.0
    %782 = vmatpush2.msra.mxu0 %v96
    %783 = vmatprep.subr.mxu0 0.0
    %784 = vmatpush2.msra.mxu0 %v95
    %785 = vmatprep.subr.mxu0 0.0
    %786 = vmatpush2.msra.mxu0 %v94
    %787 = vmatprep.subr.mxu0 0.0
    %788 = vmatpush2.msra.mxu0 %v93
    %789 = vmatprep.subr.mxu0 0.0
    %790 = vmatpush2.msra.mxu0 %v92
    %791 = vmatprep.subr.mxu0 0.0
    %792 = vmatpush2.msra.mxu0 %v91
    %793 = vmatprep.subr.mxu0 0.0
    %794 = vmatpush2.msra.mxu0 %v90
    %795 = vmatprep.subr.mxu0 0.0
    %796 = vmatpush2.msra.mxu0 %v89
    %797 = vmatprep.mubr.f32.mxu0 %v522
    %798 = vmatmul.mubr.f32.gmra.mxu0 %v520
    %v799 = vpop.f32.mrf.mxu0
    %v800 = vadd.f32 %v730, %v799
    %v801 = vpop.f32.mrf.mxu0
    %802 = vdwg.mxu0
    %803 = vmatprep.subr.mxu0 0.0
    %804 = vmatpush1.msra.mxu0 %v120
    %805 = vmatprep.subr.mxu0 0.0
    %806 = vmatpush1.msra.mxu0 %v119
    %807 = vmatprep.subr.mxu0 0.0
    %808 = vmatpush1.msra.mxu0 %v118
    %809 = vmatprep.subr.mxu0 0.0
    %810 = vmatpush1.msra.mxu0 %v117
    %811 = vmatprep.subr.mxu0 0.0
    %812 = vmatpush1.msra.mxu0 %v116
    %813 = vmatprep.subr.mxu0 0.0
    %814 = vmatpush1.msra.mxu0 %v115
    %815 = vmatprep.subr.mxu0 0.0
    %816 = vmatpush1.msra.mxu0 %v114
    %817 = vmatprep.subr.mxu0 0.0
    %818 = vmatpush1.msra.mxu0 %v113
    %819 = vmatprep.subr.mxu0 0.0
    %820 = vmatpush1.msra.mxu0 %v112
    %821 = vmatprep.subr.mxu0 0.0
    %822 = vmatpush1.msra.mxu0 %v111
    %823 = vmatprep.subr.mxu0 0.0
    %824 = vmatpush1.msra.mxu0 %v110
    %825 = vmatprep.subr.mxu0 0.0
    %826 = vmatpush1.msra.mxu0 %v109
    %827 = vmatprep.subr.mxu0 0.0
    %828 = vmatpush1.msra.mxu0 %v108
    %829 = vmatprep.subr.mxu0 0.0
    %830 = vmatpush1.msra.mxu0 %v107
    %831 = vmatprep.subr.mxu0 0.0
    %832 = vmatpush1.msra.mxu0 %v106
    %833 = vmatprep.subr.mxu0 0.0
    %834 = vmatpush1.msra.mxu0 %v105
    %835 = vmatprep.subr.mxu0 0.0
    %836 = vmatpush2.msra.mxu0 %v136
    %837 = vmatprep.subr.mxu0 0.0
    %838 = vmatpush2.msra.mxu0 %v135
    %839 = vmatprep.subr.mxu0 0.0
    %840 = vmatpush2.msra.mxu0 %v134
    %841 = vmatprep.subr.mxu0 0.0
    %842 = vmatpush2.msra.mxu0 %v133
    %843 = vmatprep.subr.mxu0 0.0
    %844 = vmatpush2.msra.mxu0 %v132
    %845 = vmatprep.subr.mxu0 0.0
    %846 = vmatpush2.msra.mxu0 %v131
    %847 = vmatprep.subr.mxu0 0.0
    %848 = vmatpush2.msra.mxu0 %v130
    %849 = vmatprep.subr.mxu0 0.0
    %850 = vmatpush2.msra.mxu0 %v129
    %851 = vmatprep.subr.mxu0 0.0
    %852 = vmatpush2.msra.mxu0 %v128
    %853 = vmatprep.subr.mxu0 0.0
    %854 = vmatpush2.msra.mxu0 %v127
    %855 = vmatprep.subr.mxu0 0.0
    %856 = vmatpush2.msra.mxu0 %v126
    %857 = vmatprep.subr.mxu0 0.0
    %858 = vmatpush2.msra.mxu0 %v125
    %859 = vmatprep.subr.mxu0 0.0
    %860 = vmatpush2.msra.mxu0 %v124
    %861 = vmatprep.subr.mxu0 0.0
    %862 = vmatpush2.msra.mxu0 %v123
    %863 = vmatprep.subr.mxu0 0.0
    %864 = vmatpush2.msra.mxu0 %v122
    %865 = vmatprep.subr.mxu0 0.0
    %866 = vmatpush2.msra.mxu0 %v121
    %867 = vmatprep.mubr.f32.mxu0 %v538
    %868 = vmatmul.mubr.f32.gmra.mxu0 %v530
    %v869 = vpop.f32.mrf.mxu0
    %v870 = vadd.f32 %v800, %v869
    %v871 = vpop.f32.mrf.mxu0
    %872 = vdwg.mxu0
    %873 = vmatprep.subr.mxu0 0.0
    %874 = vmatpush1.msra.mxu0 %v152
    %875 = vmatprep.subr.mxu0 0.0
    %876 = vmatpush1.msra.mxu0 %v151
    %877 = vmatprep.subr.mxu0 0.0
    %878 = vmatpush1.msra.mxu0 %v150
    %879 = vmatprep.subr.mxu0 0.0
    %880 = vmatpush1.msra.mxu0 %v149
    %881 = vmatprep.subr.mxu0 0.0
    %882 = vmatpush1.msra.mxu0 %v148
    %883 = vmatprep.subr.mxu0 0.0
    %884 = vmatpush1.msra.mxu0 %v147
    %885 = vmatprep.subr.mxu0 0.0
    %886 = vmatpush1.msra.mxu0 %v146
    %887 = vmatprep.subr.mxu0 0.0
    %888 = vmatpush1.msra.mxu0 %v145
    %889 = vmatprep.subr.mxu0 0.0
    %890 = vmatpush1.msra.mxu0 %v144
    %891 = vmatprep.subr.mxu0 0.0
    %892 = vmatpush1.msra.mxu0 %v143
    %893 = vmatprep.subr.mxu0 0.0
    %894 = vmatpush1.msra.mxu0 %v142
    %895 = vmatprep.subr.mxu0 0.0
    %896 = vmatpush1.msra.mxu0 %v141
    %897 = vmatprep.subr.mxu0 0.0
    %898 = vmatpush1.msra.mxu0 %v140
    %899 = vmatprep.subr.mxu0 0.0
    %900 = vmatpush1.msra.mxu0 %v139
    %901 = vmatprep.subr.mxu0 0.0
    %902 = vmatpush1.msra.mxu0 %v138
    %903 = vmatprep.subr.mxu0 0.0
    %904 = vmatpush1.msra.mxu0 %v137
    %905 = vmatprep.subr.mxu0 0.0
    %906 = vmatpush2.msra.mxu0 %v168
    %907 = vmatprep.subr.mxu0 0.0
    %908 = vmatpush2.msra.mxu0 %v167
    %909 = vmatprep.subr.mxu0 0.0
    %910 = vmatpush2.msra.mxu0 %v166
    %911 = vmatprep.subr.mxu0 0.0
    %912 = vmatpush2.msra.mxu0 %v165
    %913 = vmatprep.subr.mxu0 0.0
    %914 = vmatpush2.msra.mxu0 %v164
    %915 = vmatprep.subr.mxu0 0.0
    %916 = vmatpush2.msra.mxu0 %v163
    %917 = vmatprep.subr.mxu0 0.0
    %918 = vmatpush2.msra.mxu0 %v162
    %919 = vmatprep.subr.mxu0 0.0
    %920 = vmatpush2.msra.mxu0 %v161
    %921 = vmatprep.subr.mxu0 0.0
    %922 = vmatpush2.msra.mxu0 %v160
    %923 = vmatprep.subr.mxu0 0.0
    %924 = vmatpush2.msra.mxu0 %v159
    %925 = vmatprep.subr.mxu0 0.0
    %926 = vmatpush2.msra.mxu0 %v158
    %927 = vmatprep.subr.mxu0 0.0
    %928 = vmatpush2.msra.mxu0 %v157
    %929 = vmatprep.subr.mxu0 0.0
    %930 = vmatpush2.msra.mxu0 %v156
    %931 = vmatprep.subr.mxu0 0.0
    %932 = vmatpush2.msra.mxu0 %v155
    %933 = vmatprep.subr.mxu0 0.0
    %934 = vmatpush2.msra.mxu0 %v154
    %935 = vmatprep.subr.mxu0 0.0
    %936 = vmatpush2.msra.mxu0 %v153
    %937 = vmatprep.mubr.f32.mxu0 %v539
    %938 = vmatmul.mubr.f32.gmra.mxu0 %v537
    %v939 = vpop.f32.mrf.mxu0
    %v940 = vadd.f32 %v870, %v939
    %v941 = vpop.f32.mrf.mxu0
    %942 = vdwg.mxu0
    %943 = vmatprep.subr.mxu0 0.0
    %944 = vmatpush1.msra.mxu0 %v184
    %945 = vmatprep.subr.mxu0 0.0
    %946 = vmatpush1.msra.mxu0 %v183
    %947 = vmatprep.subr.mxu0 0.0
    %948 = vmatpush1.msra.mxu0 %v182
    %949 = vmatprep.subr.mxu0 0.0
    %950 = vmatpush1.msra.mxu0 %v181
    %951 = vmatprep.subr.mxu0 0.0
    %952 = vmatpush1.msra.mxu0 %v180
    %953 = vmatprep.subr.mxu0 0.0
    %954 = vmatpush1.msra.mxu0 %v179
    %955 = vmatprep.subr.mxu0 0.0
    %956 = vmatpush1.msra.mxu0 %v178
    %957 = vmatprep.subr.mxu0 0.0
    %958 = vmatpush1.msra.mxu0 %v177
    %959 = vmatprep.subr.mxu0 0.0
    %960 = vmatpush1.msra.mxu0 %v176
    %961 = vmatprep.subr.mxu0 0.0
    %962 = vmatpush1.msra.mxu0 %v175
    %963 = vmatprep.subr.mxu0 0.0
    %964 = vmatpush1.msra.mxu0 %v174
    %965 = vmatprep.subr.mxu0 0.0
    %966 = vmatpush1.msra.mxu0 %v173
    %967 = vmatprep.subr.mxu0 0.0
    %968 = vmatpush1.msra.mxu0 %v172
    %969 = vmatprep.subr.mxu0 0.0
    %970 = vmatpush1.msra.mxu0 %v171
    %971 = vmatprep.subr.mxu0 0.0
    %972 = vmatpush1.msra.mxu0 %v170
    %973 = vmatprep.subr.mxu0 0.0
    %974 = vmatpush1.msra.mxu0 %v169
    %975 = vmatprep.subr.mxu0 0.0
    %976 = vmatpush2.msra.mxu0 %v200
    %977 = vmatprep.subr.mxu0 0.0
    %978 = vmatpush2.msra.mxu0 %v199
    %979 = vmatprep.subr.mxu0 0.0
    %980 = vmatpush2.msra.mxu0 %v198
    %981 = vmatprep.subr.mxu0 0.0
    %982 = vmatpush2.msra.mxu0 %v197
    %983 = vmatprep.subr.mxu0 0.0
    %984 = vmatpush2.msra.mxu0 %v196
    %985 = vmatprep.subr.mxu0 0.0
    %986 = vmatpush2.msra.mxu0 %v195
    %987 = vmatprep.subr.mxu0 0.0
    %988 = vmatpush2.msra.mxu0 %v194
    %989 = vmatprep.subr.mxu0 0.0
    %990 = vmatpush2.msra.mxu0 %v193
    %991 = vmatprep.subr.mxu0 0.0
    %992 = vmatpush2.msra.mxu0 %v192
    %993 = vmatprep.subr.mxu0 0.0
    %994 = vmatpush2.msra.mxu0 %v191
    %995 = vmatprep.subr.mxu0 0.0
    %996 = vmatpush2.msra.mxu0 %v190
    %997 = vmatprep.subr.mxu0 0.0
    %998 = vmatpush2.msra.mxu0 %v189
    %999 = vmatprep.subr.mxu0 0.0
    %1000 = vmatpush2.msra.mxu0 %v188
    %1001 = vmatprep.subr.mxu0 0.0
    %1002 = vmatpush2.msra.mxu0 %v187
    %1003 = vmatprep.subr.mxu0 0.0
    %1004 = vmatpush2.msra.mxu0 %v186
    %1005 = vmatprep.subr.mxu0 0.0
    %1006 = vmatpush2.msra.mxu0 %v185
    %1007 = vmatprep.mubr.f32.mxu0 %v555
    %1008 = vmatmul.mubr.f32.gmra.mxu0 %v547
    %v1009 = vpop.f32.mrf.mxu0
    %v1010 = vadd.f32 %v940, %v1009
    %v1011 = vpop.f32.mrf.mxu0
    %1012 = vdwg.mxu0
    %1013 = vmatprep.subr.mxu0 0.0
    %1014 = vmatpush1.msra.mxu0 %v216
    %1015 = vmatprep.subr.mxu0 0.0
    %1016 = vmatpush1.msra.mxu0 %v215
    %1017 = vmatprep.subr.mxu0 0.0
    %1018 = vmatpush1.msra.mxu0 %v214
    %1019 = vmatprep.subr.mxu0 0.0
    %1020 = vmatpush1.msra.mxu0 %v213
    %1021 = vmatprep.subr.mxu0 0.0
    %1022 = vmatpush1.msra.mxu0 %v212
    %1023 = vmatprep.subr.mxu0 0.0
    %1024 = vmatpush1.msra.mxu0 %v211
    %1025 = vmatprep.subr.mxu0 0.0
    %1026 = vmatpush1.msra.mxu0 %v210
    %1027 = vmatprep.subr.mxu0 0.0
    %1028 = vmatpush1.msra.mxu0 %v209
    %1029 = vmatprep.subr.mxu0 0.0
    %1030 = vmatpush1.msra.mxu0 %v208
    %1031 = vmatprep.subr.mxu0 0.0
    %1032 = vmatpush1.msra.mxu0 %v207
    %1033 = vmatprep.subr.mxu0 0.0
    %1034 = vmatpush1.msra.mxu0 %v206
    %1035 = vmatprep.subr.mxu0 0.0
    %1036 = vmatpush1.msra.mxu0 %v205
    %1037 = vmatprep.subr.mxu0 0.0
    %1038 = vmatpush1.msra.mxu0 %v204
    %1039 = vmatprep.subr.mxu0 0.0
    %1040 = vmatpush1.msra.mxu0 %v203
    %1041 = vmatprep.subr.mxu0 0.0
    %1042 = vmatpush1.msra.mxu0 %v202
    %1043 = vmatprep.subr.mxu0 0.0
    %1044 = vmatpush1.msra.mxu0 %v201
    %1045 = vmatprep.subr.mxu0 0.0
    %1046 = vmatpush2.msra.mxu0 %v232
    %1047 = vmatprep.subr.mxu0 0.0
    %1048 = vmatpush2.msra.mxu0 %v231
    %1049 = vmatprep.subr.mxu0 0.0
    %1050 = vmatpush2.msra.mxu0 %v230
    %1051 = vmatprep.subr.mxu0 0.0
    %1052 = vmatpush2.msra.mxu0 %v229
    %1053 = vmatprep.subr.mxu0 0.0
    %1054 = vmatpush2.msra.mxu0 %v228
    %1055 = vmatprep.subr.mxu0 0.0
    %1056 = vmatpush2.msra.mxu0 %v227
    %1057 = vmatprep.subr.mxu0 0.0
    %1058 = vmatpush2.msra.mxu0 %v226
    %1059 = vmatprep.subr.mxu0 0.0
    %1060 = vmatpush2.msra.mxu0 %v225
    %1061 = vmatprep.subr.mxu0 0.0
    %1062 = vmatpush2.msra.mxu0 %v224
    %1063 = vmatprep.subr.mxu0 0.0
    %1064 = vmatpush2.msra.mxu0 %v223
    %1065 = vmatprep.subr.mxu0 0.0
    %1066 = vmatpush2.msra.mxu0 %v222
    %1067 = vmatprep.subr.mxu0 0.0
    %1068 = vmatpush2.msra.mxu0 %v221
    %1069 = vmatprep.subr.mxu0 0.0
    %1070 = vmatpush2.msra.mxu0 %v220
    %1071 = vmatprep.subr.mxu0 0.0
    %1072 = vmatpush2.msra.mxu0 %v219
    %1073 = vmatprep.subr.mxu0 0.0
    %1074 = vmatpush2.msra.mxu0 %v218
    %1075 = vmatprep.subr.mxu0 0.0
    %1076 = vmatpush2.msra.mxu0 %v217
    %1077 = vmatprep.mubr.f32.mxu0 %v556
    %1078 = vmatmul.mubr.f32.gmra.mxu0 %v554
    %v1079 = vpop.f32.mrf.mxu0
    %v1080 = vadd.f32 %v1010, %v1079
    %v1081 = vpop.f32.mrf.mxu0
    %1082 = vdwg.mxu0
    %1083 = vmatprep.subr.mxu0 0.0
    %1084 = vmatpush1.msra.mxu0 %v248
    %1085 = vmatprep.subr.mxu0 0.0
    %1086 = vmatpush1.msra.mxu0 %v247
    %1087 = vmatprep.subr.mxu0 0.0
    %1088 = vmatpush1.msra.mxu0 %v246
    %1089 = vmatprep.subr.mxu0 0.0
    %1090 = vmatpush1.msra.mxu0 %v245
    %1091 = vmatprep.subr.mxu0 0.0
    %1092 = vmatpush1.msra.mxu0 %v244
    %1093 = vmatprep.subr.mxu0 0.0
    %1094 = vmatpush1.msra.mxu0 %v243
    %1095 = vmatprep.subr.mxu0 0.0
    %1096 = vmatpush1.msra.mxu0 %v242
    %1097 = vmatprep.subr.mxu0 0.0
    %1098 = vmatpush1.msra.mxu0 %v241
    %1099 = vmatprep.subr.mxu0 0.0
    %1100 = vmatpush1.msra.mxu0 %v240
    %1101 = vmatprep.subr.mxu0 0.0
    %1102 = vmatpush1.msra.mxu0 %v239
    %1103 = vmatprep.subr.mxu0 0.0
    %1104 = vmatpush1.msra.mxu0 %v238
    %1105 = vmatprep.subr.mxu0 0.0
    %1106 = vmatpush1.msra.mxu0 %v237
    %1107 = vmatprep.subr.mxu0 0.0
    %1108 = vmatpush1.msra.mxu0 %v236
    %1109 = vmatprep.subr.mxu0 0.0
    %1110 = vmatpush1.msra.mxu0 %v235
    %1111 = vmatprep.subr.mxu0 0.0
    %1112 = vmatpush1.msra.mxu0 %v234
    %1113 = vmatprep.subr.mxu0 0.0
    %1114 = vmatpush1.msra.mxu0 %v233
    %1115 = vmatprep.subr.mxu0 0.0
    %1116 = vmatpush2.msra.mxu0 %v264
    %1117 = vmatprep.subr.mxu0 0.0
    %1118 = vmatpush2.msra.mxu0 %v263
    %1119 = vmatprep.subr.mxu0 0.0
    %1120 = vmatpush2.msra.mxu0 %v262
    %1121 = vmatprep.subr.mxu0 0.0
    %1122 = vmatpush2.msra.mxu0 %v261
    %1123 = vmatprep.subr.mxu0 0.0
    %1124 = vmatpush2.msra.mxu0 %v260
    %1125 = vmatprep.subr.mxu0 0.0
    %1126 = vmatpush2.msra.mxu0 %v259
    %1127 = vmatprep.subr.mxu0 0.0
    %1128 = vmatpush2.msra.mxu0 %v258
    %1129 = vmatprep.subr.mxu0 0.0
    %1130 = vmatpush2.msra.mxu0 %v257
    %1131 = vmatprep.subr.mxu0 0.0
    %1132 = vmatpush2.msra.mxu0 %v256
    %1133 = vmatprep.subr.mxu0 0.0
    %1134 = vmatpush2.msra.mxu0 %v255
    %1135 = vmatprep.subr.mxu0 0.0
    %1136 = vmatpush2.msra.mxu0 %v254
    %1137 = vmatprep.subr.mxu0 0.0
    %1138 = vmatpush2.msra.mxu0 %v253
    %1139 = vmatprep.subr.mxu0 0.0
    %1140 = vmatpush2.msra.mxu0 %v252
    %1141 = vmatprep.subr.mxu0 0.0
    %1142 = vmatpush2.msra.mxu0 %v251
    %1143 = vmatprep.subr.mxu0 0.0
    %1144 = vmatpush2.msra.mxu0 %v250
    %1145 = vmatprep.subr.mxu0 0.0
    %1146 = vmatpush2.msra.mxu0 %v249
    %1147 = vmatprep.mubr.f32.mxu0 %v572
    %1148 = vmatmul.mubr.f32.gmra.mxu0 %v564
    %v1149 = vpop.f32.mrf.mxu0
    %v1150 = vadd.f32 %v1080, %v1149
    %v1151 = vpop.f32.mrf.mxu0
    %1152 = vdwg.mxu0
    %1153 = vmatprep.subr.mxu0 0.0
    %1154 = vmatpush1.msra.mxu0 %v280
    %1155 = vmatprep.subr.mxu0 0.0
    %1156 = vmatpush1.msra.mxu0 %v279
    %1157 = vmatprep.subr.mxu0 0.0
    %1158 = vmatpush1.msra.mxu0 %v278
    %1159 = vmatprep.subr.mxu0 0.0
    %1160 = vmatpush1.msra.mxu0 %v277
    %1161 = vmatprep.subr.mxu0 0.0
    %1162 = vmatpush1.msra.mxu0 %v276
    %1163 = vmatprep.subr.mxu0 0.0
    %1164 = vmatpush1.msra.mxu0 %v275
    %1165 = vmatprep.subr.mxu0 0.0
    %1166 = vmatpush1.msra.mxu0 %v274
    %1167 = vmatprep.subr.mxu0 0.0
    %1168 = vmatpush1.msra.mxu0 %v273
    %1169 = vmatprep.subr.mxu0 0.0
    %1170 = vmatpush1.msra.mxu0 %v272
    %1171 = vmatprep.subr.mxu0 0.0
    %1172 = vmatpush1.msra.mxu0 %v271
    %1173 = vmatprep.subr.mxu0 0.0
    %1174 = vmatpush1.msra.mxu0 %v270
    %1175 = vmatprep.subr.mxu0 0.0
    %1176 = vmatpush1.msra.mxu0 %v269
    %1177 = vmatprep.subr.mxu0 0.0
    %1178 = vmatpush1.msra.mxu0 %v268
    %1179 = vmatprep.subr.mxu0 0.0
    %1180 = vmatpush1.msra.mxu0 %v267
    %1181 = vmatprep.subr.mxu0 0.0
    %1182 = vmatpush1.msra.mxu0 %v266
    %1183 = vmatprep.subr.mxu0 0.0
    %1184 = vmatpush1.msra.mxu0 %v265
    %1185 = vmatprep.subr.mxu0 0.0
    %1186 = vmatpush2.msra.mxu0 %v296
    %1187 = vmatprep.subr.mxu0 0.0
    %1188 = vmatpush2.msra.mxu0 %v295
    %1189 = vmatprep.subr.mxu0 0.0
    %1190 = vmatpush2.msra.mxu0 %v294
    %1191 = vmatprep.subr.mxu0 0.0
    %1192 = vmatpush2.msra.mxu0 %v293
    %1193 = vmatprep.subr.mxu0 0.0
    %1194 = vmatpush2.msra.mxu0 %v292
    %1195 = vmatprep.subr.mxu0 0.0
    %1196 = vmatpush2.msra.mxu0 %v291
    %1197 = vmatprep.subr.mxu0 0.0
    %1198 = vmatpush2.msra.mxu0 %v290
    %1199 = vmatprep.subr.mxu0 0.0
    %1200 = vmatpush2.msra.mxu0 %v289
    %1201 = vmatprep.subr.mxu0 0.0
    %1202 = vmatpush2.msra.mxu0 %v288
    %1203 = vmatprep.subr.mxu0 0.0
    %1204 = vmatpush2.msra.mxu0 %v287
    %1205 = vmatprep.subr.mxu0 0.0
    %1206 = vmatpush2.msra.mxu0 %v286
    %1207 = vmatprep.subr.mxu0 0.0
    %1208 = vmatpush2.msra.mxu0 %v285
    %1209 = vmatprep.subr.mxu0 0.0
    %1210 = vmatpush2.msra.mxu0 %v284
    %1211 = vmatprep.subr.mxu0 0.0
    %1212 = vmatpush2.msra.mxu0 %v283
    %1213 = vmatprep.subr.mxu0 0.0
    %1214 = vmatpush2.msra.mxu0 %v282
    %1215 = vmatprep.subr.mxu0 0.0
    %1216 = vmatpush2.msra.mxu0 %v281
    %1217 = vmatprep.mubr.f32.mxu0 %v573
    %1218 = vmatmul.mubr.f32.gmra.mxu0 %v571
    %v1219 = vpop.f32.mrf.mxu0
    %v1220 = vadd.f32 %v1150, %v1219
    %v1221 = vpop.f32.mrf.mxu0
    %1222 = vdwg.mxu0
    %1223 = vmatprep.subr.mxu0 0.0
    %1224 = vmatpush1.msra.mxu0 %v312
    %1225 = vmatprep.subr.mxu0 0.0
    %1226 = vmatpush1.msra.mxu0 %v311
    %1227 = vmatprep.subr.mxu0 0.0
    %1228 = vmatpush1.msra.mxu0 %v310
    %1229 = vmatprep.subr.mxu0 0.0
    %1230 = vmatpush1.msra.mxu0 %v309
    %1231 = vmatprep.subr.mxu0 0.0
    %1232 = vmatpush1.msra.mxu0 %v308
    %1233 = vmatprep.subr.mxu0 0.0
    %1234 = vmatpush1.msra.mxu0 %v307
    %1235 = vmatprep.subr.mxu0 0.0
    %1236 = vmatpush1.msra.mxu0 %v306
    %1237 = vmatprep.subr.mxu0 0.0
    %1238 = vmatpush1.msra.mxu0 %v305
    %1239 = vmatprep.subr.mxu0 0.0
    %1240 = vmatpush1.msra.mxu0 %v304
    %1241 = vmatprep.subr.mxu0 0.0
    %1242 = vmatpush1.msra.mxu0 %v303
    %1243 = vmatprep.subr.mxu0 0.0
    %1244 = vmatpush1.msra.mxu0 %v302
    %1245 = vmatprep.subr.mxu0 0.0
    %1246 = vmatpush1.msra.mxu0 %v301
    %1247 = vmatprep.subr.mxu0 0.0
    %1248 = vmatpush1.msra.mxu0 %v300
    %1249 = vmatprep.subr.mxu0 0.0
    %1250 = vmatpush1.msra.mxu0 %v299
    %1251 = vmatprep.subr.mxu0 0.0
    %1252 = vmatpush1.msra.mxu0 %v298
    %1253 = vmatprep.subr.mxu0 0.0
    %1254 = vmatpush1.msra.mxu0 %v297
    %1255 = vmatprep.subr.mxu0 0.0
    %1256 = vmatpush2.msra.mxu0 %v328
    %1257 = vmatprep.subr.mxu0 0.0
    %1258 = vmatpush2.msra.mxu0 %v327
    %1259 = vmatprep.subr.mxu0 0.0
    %1260 = vmatpush2.msra.mxu0 %v326
    %1261 = vmatprep.subr.mxu0 0.0
    %1262 = vmatpush2.msra.mxu0 %v325
    %1263 = vmatprep.subr.mxu0 0.0
    %1264 = vmatpush2.msra.mxu0 %v324
    %1265 = vmatprep.subr.mxu0 0.0
    %1266 = vmatpush2.msra.mxu0 %v323
    %1267 = vmatprep.subr.mxu0 0.0
    %1268 = vmatpush2.msra.mxu0 %v322
    %1269 = vmatprep.subr.mxu0 0.0
    %1270 = vmatpush2.msra.mxu0 %v321
    %1271 = vmatprep.subr.mxu0 0.0
    %1272 = vmatpush2.msra.mxu0 %v320
    %1273 = vmatprep.subr.mxu0 0.0
    %1274 = vmatpush2.msra.mxu0 %v319
    %1275 = vmatprep.subr.mxu0 0.0
    %1276 = vmatpush2.msra.mxu0 %v318
    %1277 = vmatprep.subr.mxu0 0.0
    %1278 = vmatpush2.msra.mxu0 %v317
    %1279 = vmatprep.subr.mxu0 0.0
    %1280 = vmatpush2.msra.mxu0 %v316
    %1281 = vmatprep.subr.mxu0 0.0
    %1282 = vmatpush2.msra.mxu0 %v315
    %1283 = vmatprep.subr.mxu0 0.0
    %1284 = vmatpush2.msra.mxu0 %v314
    %1285 = vmatprep.subr.mxu0 0.0
    %1286 = vmatpush2.msra.mxu0 %v313
    %1287 = vmatprep.mubr.f32.mxu0 %v589
    %1288 = vmatmul.mubr.f32.gmra.mxu0 %v581
    %v1289 = vpop.f32.mrf.mxu0
    %v1290 = vadd.f32 %v1220, %v1289
    %v1291 = vpop.f32.mrf.mxu0
    %1292 = vdwg.mxu0
    %1293 = vmatprep.subr.mxu0 0.0
    %1294 = vmatpush1.msra.mxu0 %v344
    %1295 = vmatprep.subr.mxu0 0.0
    %1296 = vmatpush1.msra.mxu0 %v343
    %1297 = vmatprep.subr.mxu0 0.0
    %1298 = vmatpush1.msra.mxu0 %v342
    %1299 = vmatprep.subr.mxu0 0.0
    %1300 = vmatpush1.msra.mxu0 %v341
    %1301 = vmatprep.subr.mxu0 0.0
    %1302 = vmatpush1.msra.mxu0 %v340
    %1303 = vmatprep.subr.mxu0 0.0
    %1304 = vmatpush1.msra.mxu0 %v339
    %1305 = vmatprep.subr.mxu0 0.0
    %1306 = vmatpush1.msra.mxu0 %v338
    %1307 = vmatprep.subr.mxu0 0.0
    %1308 = vmatpush1.msra.mxu0 %v337
    %1309 = vmatprep.subr.mxu0 0.0
    %1310 = vmatpush1.msra.mxu0 %v336
    %1311 = vmatprep.subr.mxu0 0.0
    %1312 = vmatpush1.msra.mxu0 %v335
    %1313 = vmatprep.subr.mxu0 0.0
    %1314 = vmatpush1.msra.mxu0 %v334
    %1315 = vmatprep.subr.mxu0 0.0
    %1316 = vmatpush1.msra.mxu0 %v333
    %1317 = vmatprep.subr.mxu0 0.0
    %1318 = vmatpush1.msra.mxu0 %v332
    %1319 = vmatprep.subr.mxu0 0.0
    %1320 = vmatpush1.msra.mxu0 %v331
    %1321 = vmatprep.subr.mxu0 0.0
    %1322 = vmatpush1.msra.mxu0 %v330
    %1323 = vmatprep.subr.mxu0 0.0
    %1324 = vmatpush1.msra.mxu0 %v329
    %1325 = vmatprep.subr.mxu0 0.0
    %1326 = vmatpush2.msra.mxu0 %v360
    %1327 = vmatprep.subr.mxu0 0.0
    %1328 = vmatpush2.msra.mxu0 %v359
    %1329 = vmatprep.subr.mxu0 0.0
    %1330 = vmatpush2.msra.mxu0 %v358
    %1331 = vmatprep.subr.mxu0 0.0
    %1332 = vmatpush2.msra.mxu0 %v357
    %1333 = vmatprep.subr.mxu0 0.0
    %1334 = vmatpush2.msra.mxu0 %v356
    %1335 = vmatprep.subr.mxu0 0.0
    %1336 = vmatpush2.msra.mxu0 %v355
    %1337 = vmatprep.subr.mxu0 0.0
    %1338 = vmatpush2.msra.mxu0 %v354
    %1339 = vmatprep.subr.mxu0 0.0
    %1340 = vmatpush2.msra.mxu0 %v353
    %1341 = vmatprep.subr.mxu0 0.0
    %1342 = vmatpush2.msra.mxu0 %v352
    %1343 = vmatprep.subr.mxu0 0.0
    %1344 = vmatpush2.msra.mxu0 %v351
    %1345 = vmatprep.subr.mxu0 0.0
    %1346 = vmatpush2.msra.mxu0 %v350
    %1347 = vmatprep.subr.mxu0 0.0
    %1348 = vmatpush2.msra.mxu0 %v349
    %1349 = vmatprep.subr.mxu0 0.0
    %1350 = vmatpush2.msra.mxu0 %v348
    %1351 = vmatprep.subr.mxu0 0.0
    %1352 = vmatpush2.msra.mxu0 %v347
    %1353 = vmatprep.subr.mxu0 0.0
    %1354 = vmatpush2.msra.mxu0 %v346
    %1355 = vmatprep.subr.mxu0 0.0
    %1356 = vmatpush2.msra.mxu0 %v345
    %1357 = vmatprep.mubr.f32.mxu0 %v590
    %1358 = vmatmul.mubr.f32.gmra.mxu0 %v588
    %v1359 = vpop.f32.mrf.mxu0
    %v1360 = vadd.f32 %v1290, %v1359
    %v1361 = vpop.f32.mrf.mxu0
    %1362 = vdwg.mxu0
    %1363 = vmatprep.subr.mxu0 0.0
    %1364 = vmatpush1.msra.mxu0 %v376
    %1365 = vmatprep.subr.mxu0 0.0
    %1366 = vmatpush1.msra.mxu0 %v375
    %1367 = vmatprep.subr.mxu0 0.0
    %1368 = vmatpush1.msra.mxu0 %v374
    %1369 = vmatprep.subr.mxu0 0.0
    %1370 = vmatpush1.msra.mxu0 %v373
    %1371 = vmatprep.subr.mxu0 0.0
    %1372 = vmatpush1.msra.mxu0 %v372
    %1373 = vmatprep.subr.mxu0 0.0
    %1374 = vmatpush1.msra.mxu0 %v371
    %1375 = vmatprep.subr.mxu0 0.0
    %1376 = vmatpush1.msra.mxu0 %v370
    %1377 = vmatprep.subr.mxu0 0.0
    %1378 = vmatpush1.msra.mxu0 %v369
    %1379 = vmatprep.subr.mxu0 0.0
    %1380 = vmatpush1.msra.mxu0 %v368
    %1381 = vmatprep.subr.mxu0 0.0
    %1382 = vmatpush1.msra.mxu0 %v367
    %1383 = vmatprep.subr.mxu0 0.0
    %1384 = vmatpush1.msra.mxu0 %v366
    %1385 = vmatprep.subr.mxu0 0.0
    %1386 = vmatpush1.msra.mxu0 %v365
    %1387 = vmatprep.subr.mxu0 0.0
    %1388 = vmatpush1.msra.mxu0 %v364
    %1389 = vmatprep.subr.mxu0 0.0
    %1390 = vmatpush1.msra.mxu0 %v363
    %1391 = vmatprep.subr.mxu0 0.0
    %1392 = vmatpush1.msra.mxu0 %v362
    %1393 = vmatprep.subr.mxu0 0.0
    %1394 = vmatpush1.msra.mxu0 %v361
    %1395 = vmatprep.subr.mxu0 0.0
    %1396 = vmatpush2.msra.mxu0 %v392
    %1397 = vmatprep.subr.mxu0 0.0
    %1398 = vmatpush2.msra.mxu0 %v391
    %1399 = vmatprep.subr.mxu0 0.0
    %1400 = vmatpush2.msra.mxu0 %v390
    %1401 = vmatprep.subr.mxu0 0.0
    %1402 = vmatpush2.msra.mxu0 %v389
    %1403 = vmatprep.subr.mxu0 0.0
    %1404 = vmatpush2.msra.mxu0 %v388
    %1405 = vmatprep.subr.mxu0 0.0
    %1406 = vmatpush2.msra.mxu0 %v387
    %1407 = vmatprep.subr.mxu0 0.0
    %1408 = vmatpush2.msra.mxu0 %v386
    %1409 = vmatprep.subr.mxu0 0.0
    %1410 = vmatpush2.msra.mxu0 %v385
    %1411 = vmatprep.subr.mxu0 0.0
    %1412 = vmatpush2.msra.mxu0 %v384
    %1413 = vmatprep.subr.mxu0 0.0
    %1414 = vmatpush2.msra.mxu0 %v383
    %1415 = vmatprep.subr.mxu0 0.0
    %1416 = vmatpush2.msra.mxu0 %v382
    %1417 = vmatprep.subr.mxu0 0.0
    %1418 = vmatpush2.msra.mxu0 %v381
    %1419 = vmatprep.subr.mxu0 0.0
    %1420 = vmatpush2.msra.mxu0 %v380
    %1421 = vmatprep.subr.mxu0 0.0
    %1422 = vmatpush2.msra.mxu0 %v379
    %1423 = vmatprep.subr.mxu0 0.0
    %1424 = vmatpush2.msra.mxu0 %v378
    %1425 = vmatprep.subr.mxu0 0.0
    %1426 = vmatpush2.msra.mxu0 %v377
    %1427 = vmatprep.mubr.f32.mxu0 %v606
    %1428 = vmatmul.mubr.f32.gmra.mxu0 %v598
    %v1429 = vpop.f32.mrf.mxu0
    %v1430 = vadd.f32 %v1360, %v1429
    %v1431 = vpop.f32.mrf.mxu0
    %1432 = vdwg.mxu0
    %1433 = vmatprep.subr.mxu0 0.0
    %1434 = vmatpush1.msra.mxu0 %v408
    %1435 = vmatprep.subr.mxu0 0.0
    %1436 = vmatpush1.msra.mxu0 %v407
    %1437 = vmatprep.subr.mxu0 0.0
    %1438 = vmatpush1.msra.mxu0 %v406
    %1439 = vmatprep.subr.mxu0 0.0
    %1440 = vmatpush1.msra.mxu0 %v405
    %1441 = vmatprep.subr.mxu0 0.0
    %1442 = vmatpush1.msra.mxu0 %v404
    %1443 = vmatprep.subr.mxu0 0.0
    %1444 = vmatpush1.msra.mxu0 %v403
    %1445 = vmatprep.subr.mxu0 0.0
    %1446 = vmatpush1.msra.mxu0 %v402
    %1447 = vmatprep.subr.mxu0 0.0
    %1448 = vmatpush1.msra.mxu0 %v401
    %1449 = vmatprep.subr.mxu0 0.0
    %1450 = vmatpush1.msra.mxu0 %v400
    %1451 = vmatprep.subr.mxu0 0.0
    %1452 = vmatpush1.msra.mxu0 %v399
    %1453 = vmatprep.subr.mxu0 0.0
    %1454 = vmatpush1.msra.mxu0 %v398
    %1455 = vmatprep.subr.mxu0 0.0
    %1456 = vmatpush1.msra.mxu0 %v397
    %1457 = vmatprep.subr.mxu0 0.0
    %1458 = vmatpush1.msra.mxu0 %v396
    %1459 = vmatprep.subr.mxu0 0.0
    %1460 = vmatpush1.msra.mxu0 %v395
    %1461 = vmatprep.subr.mxu0 0.0
    %1462 = vmatpush1.msra.mxu0 %v394
    %1463 = vmatprep.subr.mxu0 0.0
    %1464 = vmatpush1.msra.mxu0 %v393
    %1465 = vmatprep.subr.mxu0 0.0
    %1466 = vmatpush2.msra.mxu0 %v424
    %1467 = vmatprep.subr.mxu0 0.0
    %1468 = vmatpush2.msra.mxu0 %v423
    %1469 = vmatprep.subr.mxu0 0.0
    %1470 = vmatpush2.msra.mxu0 %v422
    %1471 = vmatprep.subr.mxu0 0.0
    %1472 = vmatpush2.msra.mxu0 %v421
    %1473 = vmatprep.subr.mxu0 0.0
    %1474 = vmatpush2.msra.mxu0 %v420
    %1475 = vmatprep.subr.mxu0 0.0
    %1476 = vmatpush2.msra.mxu0 %v419
    %1477 = vmatprep.subr.mxu0 0.0
    %1478 = vmatpush2.msra.mxu0 %v418
    %1479 = vmatprep.subr.mxu0 0.0
    %1480 = vmatpush2.msra.mxu0 %v417
    %1481 = vmatprep.subr.mxu0 0.0
    %1482 = vmatpush2.msra.mxu0 %v416
    %1483 = vmatprep.subr.mxu0 0.0
    %1484 = vmatpush2.msra.mxu0 %v415
    %1485 = vmatprep.subr.mxu0 0.0
    %1486 = vmatpush2.msra.mxu0 %v414
    %1487 = vmatprep.subr.mxu0 0.0
    %1488 = vmatpush2.msra.mxu0 %v413
    %1489 = vmatprep.subr.mxu0 0.0
    %1490 = vmatpush2.msra.mxu0 %v412
    %1491 = vmatprep.subr.mxu0 0.0
    %1492 = vmatpush2.msra.mxu0 %v411
    %1493 = vmatprep.subr.mxu0 0.0
    %1494 = vmatpush2.msra.mxu0 %v410
    %1495 = vmatprep.subr.mxu0 0.0
    %1496 = vmatpush2.msra.mxu0 %v409
    %1497 = vmatprep.mubr.f32.mxu0 %v607
    %1498 = vmatmul.mubr.f32.gmra.mxu0 %v605
    %v1499 = vpop.f32.mrf.mxu0
    %v1500 = vadd.f32 %v1430, %v1499
    %v1501 = vpop.f32.mrf.mxu0
    %1502 = vdwg.mxu0
    %1503 = vmatprep.subr.mxu0 0.0
    %1504 = vmatpush1.msra.mxu0 %v440
    %1505 = vmatprep.subr.mxu0 0.0
    %1506 = vmatpush1.msra.mxu0 %v439
    %1507 = vmatprep.subr.mxu0 0.0
    %1508 = vmatpush1.msra.mxu0 %v438
    %1509 = vmatprep.subr.mxu0 0.0
    %1510 = vmatpush1.msra.mxu0 %v437
    %1511 = vmatprep.subr.mxu0 0.0
    %1512 = vmatpush1.msra.mxu0 %v436
    %1513 = vmatprep.subr.mxu0 0.0
    %1514 = vmatpush1.msra.mxu0 %v435
    %1515 = vmatprep.subr.mxu0 0.0
    %1516 = vmatpush1.msra.mxu0 %v434
    %1517 = vmatprep.subr.mxu0 0.0
    %1518 = vmatpush1.msra.mxu0 %v433
    %1519 = vmatprep.subr.mxu0 0.0
    %1520 = vmatpush1.msra.mxu0 %v432
    %1521 = vmatprep.subr.mxu0 0.0
    %1522 = vmatpush1.msra.mxu0 %v431
    %1523 = vmatprep.subr.mxu0 0.0
    %1524 = vmatpush1.msra.mxu0 %v430
    %1525 = vmatprep.subr.mxu0 0.0
    %1526 = vmatpush1.msra.mxu0 %v429
    %1527 = vmatprep.subr.mxu0 0.0
    %1528 = vmatpush1.msra.mxu0 %v428
    %1529 = vmatprep.subr.mxu0 0.0
    %1530 = vmatpush1.msra.mxu0 %v427
    %1531 = vmatprep.subr.mxu0 0.0
    %1532 = vmatpush1.msra.mxu0 %v426
    %1533 = vmatprep.subr.mxu0 0.0
    %1534 = vmatpush1.msra.mxu0 %v425
    %1535 = vmatprep.subr.mxu0 0.0
    %1536 = vmatpush2.msra.mxu0 %v456
    %1537 = vmatprep.subr.mxu0 0.0
    %1538 = vmatpush2.msra.mxu0 %v455
    %1539 = vmatprep.subr.mxu0 0.0
    %1540 = vmatpush2.msra.mxu0 %v454
    %1541 = vmatprep.subr.mxu0 0.0
    %1542 = vmatpush2.msra.mxu0 %v453
    %1543 = vmatprep.subr.mxu0 0.0
    %1544 = vmatpush2.msra.mxu0 %v452
    %1545 = vmatprep.subr.mxu0 0.0
    %1546 = vmatpush2.msra.mxu0 %v451
    %1547 = vmatprep.subr.mxu0 0.0
    %1548 = vmatpush2.msra.mxu0 %v450
    %1549 = vmatprep.subr.mxu0 0.0
    %1550 = vmatpush2.msra.mxu0 %v449
    %1551 = vmatprep.subr.mxu0 0.0
    %1552 = vmatpush2.msra.mxu0 %v448
    %1553 = vmatprep.subr.mxu0 0.0
    %1554 = vmatpush2.msra.mxu0 %v447
    %1555 = vmatprep.subr.mxu0 0.0
    %1556 = vmatpush2.msra.mxu0 %v446
    %1557 = vmatprep.subr.mxu0 0.0
    %1558 = vmatpush2.msra.mxu0 %v445
    %1559 = vmatprep.subr.mxu0 0.0
    %1560 = vmatpush2.msra.mxu0 %v444
    %1561 = vmatprep.subr.mxu0 0.0
    %1562 = vmatpush2.msra.mxu0 %v443
    %1563 = vmatprep.subr.mxu0 0.0
    %1564 = vmatpush2.msra.mxu0 %v442
    %1565 = vmatprep.subr.mxu0 0.0
    %1566 = vmatpush2.msra.mxu0 %v441
    %1567 = vmatprep.mubr.f32.mxu0 %v623
    %1568 = vmatmul.mubr.f32.gmra.mxu0 %v615
    %v1569 = vpop.f32.mrf.mxu0
    %v1570 = vadd.f32 %v1500, %v1569
    %v1571 = vpop.f32.mrf.mxu0
    %1572 = vdwg.mxu0
    %1573 = vmatprep.subr.mxu0 0.0
    %1574 = vmatpush1.msra.mxu0 %v472
    %1575 = vmatprep.subr.mxu0 0.0
    %1576 = vmatpush1.msra.mxu0 %v471
    %1577 = vmatprep.subr.mxu0 0.0
    %1578 = vmatpush1.msra.mxu0 %v470
    %1579 = vmatprep.subr.mxu0 0.0
    %1580 = vmatpush1.msra.mxu0 %v469
    %1581 = vmatprep.subr.mxu0 0.0
    %1582 = vmatpush1.msra.mxu0 %v468
    %1583 = vmatprep.subr.mxu0 0.0
    %1584 = vmatpush1.msra.mxu0 %v467
    %1585 = vmatprep.subr.mxu0 0.0
    %1586 = vmatpush1.msra.mxu0 %v466
    %1587 = vmatprep.subr.mxu0 0.0
    %1588 = vmatpush1.msra.mxu0 %v465
    %1589 = vmatprep.subr.mxu0 0.0
    %1590 = vmatpush1.msra.mxu0 %v464
    %1591 = vmatprep.subr.mxu0 0.0
    %1592 = vmatpush1.msra.mxu0 %v463
    %1593 = vmatprep.subr.mxu0 0.0
    %1594 = vmatpush1.msra.mxu0 %v462
    %1595 = vmatprep.subr.mxu0 0.0
    %1596 = vmatpush1.msra.mxu0 %v461
    %1597 = vmatprep.subr.mxu0 0.0
    %1598 = vmatpush1.msra.mxu0 %v460
    %1599 = vmatprep.subr.mxu0 0.0
    %1600 = vmatpush1.msra.mxu0 %v459
    %1601 = vmatprep.subr.mxu0 0.0
    %1602 = vmatpush1.msra.mxu0 %v458
    %1603 = vmatprep.subr.mxu0 0.0
    %1604 = vmatpush1.msra.mxu0 %v457
    %1605 = vmatprep.subr.mxu0 0.0
    %1606 = vmatpush2.msra.mxu0 %v488
    %1607 = vmatprep.subr.mxu0 0.0
    %1608 = vmatpush2.msra.mxu0 %v487
    %1609 = vmatprep.subr.mxu0 0.0
    %1610 = vmatpush2.msra.mxu0 %v486
    %1611 = vmatprep.subr.mxu0 0.0
    %1612 = vmatpush2.msra.mxu0 %v485
    %1613 = vmatprep.subr.mxu0 0.0
    %1614 = vmatpush2.msra.mxu0 %v484
    %1615 = vmatprep.subr.mxu0 0.0
    %1616 = vmatpush2.msra.mxu0 %v483
    %1617 = vmatprep.subr.mxu0 0.0
    %1618 = vmatpush2.msra.mxu0 %v482
    %1619 = vmatprep.subr.mxu0 0.0
    %1620 = vmatpush2.msra.mxu0 %v481
    %1621 = vmatprep.subr.mxu0 0.0
    %1622 = vmatpush2.msra.mxu0 %v480
    %1623 = vmatprep.subr.mxu0 0.0
    %1624 = vmatpush2.msra.mxu0 %v479
    %1625 = vmatprep.subr.mxu0 0.0
    %1626 = vmatpush2.msra.mxu0 %v478
    %1627 = vmatprep.subr.mxu0 0.0
    %1628 = vmatpush2.msra.mxu0 %v477
    %1629 = vmatprep.subr.mxu0 0.0
    %1630 = vmatpush2.msra.mxu0 %v476
    %1631 = vmatprep.subr.mxu0 0.0
    %1632 = vmatpush2.msra.mxu0 %v475
    %1633 = vmatprep.subr.mxu0 0.0
    %1634 = vmatpush2.msra.mxu0 %v474
    %1635 = vmatprep.subr.mxu0 0.0
    %1636 = vmatpush2.msra.mxu0 %v473
    %1637 = vmatprep.mubr.f32.mxu0 %v624
    %1638 = vmatmul.mubr.f32.gmra.mxu0 %v622
    %v1639 = vpop.f32.mrf.mxu0
    %v1640 = vadd.f32 %v1570, %v1639
    %v1641 = vpop.f32.mrf.mxu0
    %1642 = vdwg.mxu0
    %1643 = vmatprep.subr.mxu0 0.0
    %1644 = vmatpush1.msra.mxu0 0.0
    %1645 = vmatprep.subr.mxu0 0.0
    %1646 = vmatpush1.msra.mxu0 0.0
    %1647 = vmatprep.subr.mxu0 0.0
    %1648 = vmatpush1.msra.mxu0 0.0
    %1649 = vmatprep.subr.mxu0 0.0
    %1650 = vmatpush1.msra.mxu0 0.0
    %1651 = vmatprep.subr.mxu0 0.0
    %1652 = vmatpush1.msra.mxu0 0.0
    %1653 = vmatprep.subr.mxu0 0.0
    %1654 = vmatpush1.msra.mxu0 0.0
    %1655 = vmatprep.subr.mxu0 0.0
    %1656 = vmatpush1.msra.mxu0 0.0
    %1657 = vmatprep.subr.mxu0 0.0
    %1658 = vmatpush1.msra.mxu0 0.0
    %1659 = vmatprep.subr.mxu0 0.0
    %1660 = vmatpush1.msra.mxu0 0.0
    %1661 = vmatprep.subr.mxu0 0.0
    %1662 = vmatpush1.msra.mxu0 0.0
    %1663 = vmatprep.subr.mxu0 0.0
    %1664 = vmatpush1.msra.mxu0 0.0
    %1665 = vmatprep.subr.mxu0 0.0
    %1666 = vmatpush1.msra.mxu0 0.0
    %1667 = vmatprep.subr.mxu0 0.0
    %1668 = vmatpush1.msra.mxu0 0.0
    %1669 = vmatprep.subr.mxu0 0.0
    %1670 = vmatpush1.msra.mxu0 0.0
    %1671 = vmatprep.subr.mxu0 0.0
    %1672 = vmatpush1.msra.mxu0 %v490
    %1673 = vmatprep.subr.mxu0 0.0
    %1674 = vmatpush1.msra.mxu0 %v489
    %1675 = vmatprep.subr.mxu0 0.0
    %1676 = vmatpush2.msra.mxu0 0.0
    %1677 = vmatprep.subr.mxu0 0.0
    %1678 = vmatpush2.msra.mxu0 0.0
    %1679 = vmatprep.subr.mxu0 0.0
    %1680 = vmatpush2.msra.mxu0 0.0
    %1681 = vmatprep.subr.mxu0 0.0
    %1682 = vmatpush2.msra.mxu0 0.0
    %1683 = vmatprep.subr.mxu0 0.0
    %1684 = vmatpush2.msra.mxu0 0.0
    %1685 = vmatprep.subr.mxu0 0.0
    %1686 = vmatpush2.msra.mxu0 0.0
    %1687 = vmatprep.subr.mxu0 0.0
    %1688 = vmatpush2.msra.mxu0 0.0
    %1689 = vmatprep.subr.mxu0 0.0
    %1690 = vmatpush2.msra.mxu0 0.0
    %1691 = vmatprep.subr.mxu0 0.0
    %1692 = vmatpush2.msra.mxu0 0.0
    %1693 = vmatprep.subr.mxu0 0.0
    %1694 = vmatpush2.msra.mxu0 0.0
    %1695 = vmatprep.subr.mxu0 0.0
    %1696 = vmatpush2.msra.mxu0 0.0
    %1697 = vmatprep.subr.mxu0 0.0
    %1698 = vmatpush2.msra.mxu0 0.0
    %1699 = vmatprep.subr.mxu0 0.0
    %1700 = vmatpush2.msra.mxu0 0.0
    %1701 = vmatprep.subr.mxu0 0.0
    %1702 = vmatpush2.msra.mxu0 0.0
    %1703 = vmatprep.subr.mxu0 0.0
    %1704 = vmatpush2.msra.mxu0 0.0
    %1705 = vmatprep.subr.mxu0 0.0
    %1706 = vmatpush2.msra.mxu0 0.0
    %1707 = vmatprep.mubr.f32.mxu0 0.0
    %1708 = vmatmul.mubr.f32.gmra.mxu0 %v661
    %v1709 = vpop.f32.mrf.mxu0
    %v1710 = vadd.f32 %v1640, %v1709
    %v1711 = vpop.f32.mrf.mxu0
    %1712 = vdwg.mxu0
    %v1713 = vmax.f32 %v1710, 0.0
    %v1714 = vld [vmem:[%s3] sm:$0x1]
    %v1715 = vld [vmem:[%s4] sm:$0x1]
    %vm1716 = vcmask 517120
    %v1717 = vsel %vm1716, %v1713, 0.0
    %1718 = vadd.xlane.f32.xlu0 %v1717
    %v1719 = vpop.xlane.xlu0 %1718
    %v1720 = vrcp.pop 64.0
    %v1721 = vmul.f32 %v1719, %v1720
    %v1722 = vsub.f32 %v1713, %v1721
    %v1723 = vmul.f32 %v1722, %v1722
    %v1724 = vsel %vm1716, %v1723, 0.0
    %1725 = vadd.xlane.f32.xlu0 %v1724
    %v1726 = vpop.xlane.xlu0 %1725
    %v1727 = vmul.f32 %v1726, %v1720
    %v1728 = vadd.f32 %v1727, 1e-05
    %v1729 = vrsqrt.pop %v1728
    %v1730 = vmul.f32 %v1722, %v1729
    %v1732 = vlaneseq
    %v1733 = vshrl.u32 %v1732, 7
    %v1734 = vsub.s32 0, %v1733
    %v1735 = vrot.slane %v1714, %v1734
    %v1737 = vmul.f32 %v1730, %v1735
    %v1739 = vlaneseq
    %v1740 = vshrl.u32 %v1739, 7
    %v1741 = vsub.s32 0, %v1740
    %v1742 = vrot.slane %v1715, %v1741
    %v1744 = vadd.f32 %v1737, %v1742
    %v1745 = vld [vmem:[%s5] sm:$0xff]
    %v1746 = vld [vmem:[%s5 + $0x8] sm:$0xff]
    %v1747 = vld [vmem:[%s5 + $0x10] sm:$0xff]
    %v1748 = vld [vmem:[%s5 + $0x18] sm:$0xff]
    %v1749 = vld [vmem:[%s5 + $0x20] sm:$0xff]
    %v1750 = vld [vmem:[%s5 + $0x28] sm:$0xff]
    %v1751 = vld [vmem:[%s5 + $0x30] sm:$0xff]
    %v1752 = vld [vmem:[%s5 + $0x38] sm:$0xff]
    %v1753 = vld [vmem:[%s6] sm:$0x1]
    %v1755 = vlaneseq
    %v1756 = vshrl.u32 %v1755, 7
    %v1757 = vsub.s32 0, %v1756
    %v1758 = vrot.slane %v1753, %v1757
    %vm1760 = vcmask 523264
    %v1762 = vsel %vm1760, %v1744, 0
    %1764 = vmatprep.subr.mxu0 0.0
    %1765 = vmatpush1.msra.mxu0 0.0
    %1766 = vmatprep.subr.mxu0 0.0
    %1767 = vmatpush1.msra.mxu0 0.0
    %1768 = vmatprep.subr.mxu0 0.0
    %1769 = vmatpush1.msra.mxu0 0.0
    %1770 = vmatprep.subr.mxu0 0.0
    %1771 = vmatpush1.msra.mxu0 0.0
    %1772 = vmatprep.subr.mxu0 0.0
    %1773 = vmatpush1.msra.mxu0 0.0
    %1774 = vmatprep.subr.mxu0 0.0
    %1775 = vmatpush1.msra.mxu0 0.0
    %1776 = vmatprep.subr.mxu0 0.0
    %1777 = vmatpush1.msra.mxu0 0.0
    %1778 = vmatprep.subr.mxu0 0.0
    %1779 = vmatpush1.msra.mxu0 0.0
    %1780 = vmatprep.subr.mxu0 0.0
    %1781 = vmatpush1.msra.mxu0 %v1752
    %1782 = vmatprep.subr.mxu0 0.0
    %1783 = vmatpush1.msra.mxu0 %v1751
    %1784 = vmatprep.subr.mxu0 0.0
    %1785 = vmatpush1.msra.mxu0 %v1750
    %1786 = vmatprep.subr.mxu0 0.0
    %1787 = vmatpush1.msra.mxu0 %v1749
    %1788 = vmatprep.subr.mxu0 0.0
    %1789 = vmatpush1.msra.mxu0 %v1748
    %1790 = vmatprep.subr.mxu0 0.0
    %1791 = vmatpush1.msra.mxu0 %v1747
    %1792 = vmatprep.subr.mxu0 0.0
    %1793 = vmatpush1.msra.mxu0 %v1746
    %1794 = vmatprep.subr.mxu0 0.0
    %1795 = vmatpush1.msra.mxu0 %v1745
    %1796 = vmatprep.subr.mxu0 0.0
    %1797 = vmatpush2.msra.mxu0 0.0
    %1798 = vmatprep.subr.mxu0 0.0
    %1799 = vmatpush2.msra.mxu0 0.0
    %1800 = vmatprep.subr.mxu0 0.0
    %1801 = vmatpush2.msra.mxu0 0.0
    %1802 = vmatprep.subr.mxu0 0.0
    %1803 = vmatpush2.msra.mxu0 0.0
    %1804 = vmatprep.subr.mxu0 0.0
    %1805 = vmatpush2.msra.mxu0 0.0
    %1806 = vmatprep.subr.mxu0 0.0
    %1807 = vmatpush2.msra.mxu0 0.0
    %1808 = vmatprep.subr.mxu0 0.0
    %1809 = vmatpush2.msra.mxu0 0.0
    %1810 = vmatprep.subr.mxu0 0.0
    %1811 = vmatpush2.msra.mxu0 0.0
    %1812 = vmatprep.subr.mxu0 0.0
    %1813 = vmatpush2.msra.mxu0 0.0
    %1814 = vmatprep.subr.mxu0 0.0
    %1815 = vmatpush2.msra.mxu0 0.0
    %1816 = vmatprep.subr.mxu0 0.0
    %1817 = vmatpush2.msra.mxu0 0.0
    %1818 = vmatprep.subr.mxu0 0.0
    %1819 = vmatpush2.msra.mxu0 0.0
    %1820 = vmatprep.subr.mxu0 0.0
    %1821 = vmatpush2.msra.mxu0 0.0
    %1822 = vmatprep.subr.mxu0 0.0
    %1823 = vmatpush2.msra.mxu0 0.0
    %1824 = vmatprep.subr.mxu0 0.0
    %1825 = vmatpush2.msra.mxu0 0.0
    %1826 = vmatprep.subr.mxu0 0.0
    %1827 = vmatpush2.msra.mxu0 0.0
    %1828 = vmatprep.mubr.f32.mxu0 0.0
    %1829 = vmatmul.mubr.f32.gmra.mxu0 %v1762
    %v1830 = vpop.f32.mrf.mxu0
    %v1831 = vadd.f32 %v1758, %v1830
    %v1832 = vpop.f32.mrf.mxu0
    %1833 = vdwg.mxu0
    %v1834 = vmax.f32 %v1831, 0.0
    %v1835 = vld [vmem:[%s7] sm:$0x1]
    %v1836 = vld [vmem:[%s8] sm:$0x1]
    %v1837 = vsel %vm1716, %v1834, 0.0
    %1838 = vadd.xlane.f32.xlu0 %v1837
    %v1839 = vpop.xlane.xlu0 %1838
    %v1840 = vmul.f32 %v1839, %v1720
    %v1841 = vsub.f32 %v1834, %v1840
    %v1842 = vmul.f32 %v1841, %v1841
    %v1843 = vsel %vm1716, %v1842, 0.0
    %1844 = vadd.xlane.f32.xlu0 %v1843
    %v1845 = vpop.xlane.xlu0 %1844
    %v1846 = vmul.f32 %v1845, %v1720
    %v1847 = vadd.f32 %v1846, 1e-05
    %v1848 = vrsqrt.pop %v1847
    %v1849 = vmul.f32 %v1841, %v1848
    %v1851 = vlaneseq
    %v1852 = vshrl.u32 %v1851, 7
    %v1853 = vsub.s32 0, %v1852
    %v1854 = vrot.slane %v1835, %v1853
    %v1856 = vmul.f32 %v1849, %v1854
    %v1858 = vlaneseq
    %v1859 = vshrl.u32 %v1858, 7
    %v1860 = vsub.s32 0, %v1859
    %v1861 = vrot.slane %v1836, %v1860
    %v1863 = vadd.f32 %v1856, %v1861
    %1864 = vst.msk [vmem:[#allocation2] sm:$0x3] %vm1716, %v1863
    // Predicated region
    $region38: #{mixer_base2_forward.1} parent=1 // pred_check
      _
    $region39: #{mixer_base2_forward.1} parent=1 // pred_check_branch
      %1866 = sbr.rel (0) target = $region41
    $region40: #{mixer_base2_forward.1} parent=1 // pred_region
      %s1868 = ssub.s32 32, 32
      %1869 = vsyncadd [#allocation3], %s1868
      %s1871 = sshll.u32 [#allocation2], 4
      %s1872 = int_to_ptr.vmem [resolvable:$true] %s1871
      %1874 = dma.vmem_to_hbm [thread:$0]  %s1872, 32, %s9, [#allocation3]
    $region41: #{mixer_base2_forward.1} parent=1 // pred_fallthru
      _
    // Predicated region
    $region42: #{mixer_base2_forward.1} parent=1 // pred_check
      _
    $region43: #{mixer_base2_forward.1} parent=1 // pred_check_branch
      %1876 = sbr.rel (0) target = $region45
    $region44: #{mixer_base2_forward.1} parent=1 // pred_region
      %1877 = dma.done [#allocation3], 32
    $region45: #{mixer_base2_forward.1} parent=1 // pred_fallthru
      _
    %1878 = vsyncpa [#allocation3], 1

</llo_original>
